<compile_context>
chip_gen: v6e
topology: v6e:2x2x1
jax: 0.10.0
libtpu: 0.0.40
codegen_flags: <defaults>
</compile_context>

<pallas_src>
import jax
import jax.numpy as jnp
from jax.experimental import pallas as pl
from jax.experimental.pallas import tpu as pltpu


def vae_kernel(x_ref, eps_ref,
               w1_ref, b1_ref, wml_ref, bml_ref,
               w2_ref, b2_ref, w3_ref, b3_ref,
               xrec_ref, mulv_ref):
    """One batch tile: full encoder -> reparameterize -> decoder.

    Weights arrive as bf16; matmuls accumulate in f32 on the MXU; all elementwise /
    transcendental math stays f32.
    """
    lp = eps_ref.shape[-1]          # padded latent dim (128)
    x = x_ref[...]                  # [tb, D] f32

    # ---- Encoder layer 1 ----
    h1 = jnp.dot(x.astype(jnp.bfloat16), w1_ref[...],
                 preferred_element_type=jnp.float32) + b1_ref[...]
    h1 = jnp.maximum(h1, 0.0)

    # ---- Fused mu/logvar head: one [H, 2*Lp] matmul, lane-dense output ----
    mulv = jnp.dot(h1.astype(jnp.bfloat16), wml_ref[...],
                   preferred_element_type=jnp.float32) + bml_ref[...]
    mulv_ref[...] = mulv            # dense 2*Lp-lane store; sliced to mu/logvar outside

    mu_p = mulv[:, :lp]             # [tb, Lp]
    lv_p = mulv[:, lp:]             # [tb, Lp]

    # ---- Reparameterize (f32, full 128-lane vregs) ----
    z = mu_p + eps_ref[...] * jnp.exp(0.5 * lv_p)

    # ---- Decoder ----
    h2 = jnp.dot(z.astype(jnp.bfloat16), w2_ref[...],
                 preferred_element_type=jnp.float32) + b2_ref[...]
    h2 = jnp.maximum(h2, 0.0)
    logits = jnp.dot(h2.astype(jnp.bfloat16), w3_ref[...],
                     preferred_element_type=jnp.float32) + b3_ref[...]
    xrec_ref[...] = jax.nn.sigmoid(logits)


def vae_forward(x, eps, params, *, tb=128):
    """x: [B, input_dim] f32, eps: [B, latent_dim] f32 -> (x_rec, mu, logvar)."""
    B, D = x.shape
    L = eps.shape[1]
    H = params["w1"].shape[1]
    Lp = max(128, ((L + 127) // 128) * 128)   # latent padded to full 128-lane vregs

    # Pad batch up to a multiple of the tile.
    Bp = pl.cdiv(B, tb) * tb
    if Bp != B:
        x = jnp.pad(x, ((0, Bp - B), (0, 0)))
        eps = jnp.pad(eps, ((0, Bp - B), (0, 0)))
    eps_p = jnp.pad(eps, ((0, 0), (0, Lp - L)))

    bf16 = jnp.bfloat16
    # Fused + zero-padded latent-head weights: [H, 2*Lp], cols [0:L]=Wmu, [Lp:Lp+L]=Wlv.
    wml = jnp.zeros((H, 2 * Lp), jnp.float32)
    wml = wml.at[:, :L].set(params["wmu"]).at[:, Lp:Lp + L].set(params["wlv"])
    bml = jnp.zeros((1, 2 * Lp), jnp.float32)
    bml = bml.at[:, :L].set(params["bmu"]).at[:, Lp:Lp + L].set(params["blv"])
    # Decoder first layer padded along K: rows [L:Lp] are zero.
    w2p = jnp.zeros((Lp, H), jnp.float32).at[:L, :].set(params["w2"])

    # bf16 matmul operands (f32 accumulation happens on the MXU).
    w1 = params["w1"].astype(bf16)
    wml = wml.astype(bf16)
    w2p = w2p.astype(bf16)
    w3 = params["w3"].astype(bf16)
    b1, b2, b3 = params["b1"], params["b2"], params["b3"]   # biases stay f32

    # Small weights: each passed as one full block resident in VMEM; only the batch is
    # tiled across the grid.  (Constant-index blocks are not re-fetched between steps.)
    def full_spec(shape):
        return pl.BlockSpec(shape, lambda i: (0,) * len(shape))

    grid = (Bp // tb,)
    in_specs = [
        pl.BlockSpec((tb, D), lambda i: (i, 0)),        # x
        pl.BlockSpec((tb, Lp), lambda i: (i, 0)),       # eps (padded)
        full_spec((D, H)), full_spec((1, H)),           # w1, b1
        full_spec((H, 2 * Lp)), full_spec((1, 2 * Lp)), # fused wmu|wlv, bmu|blv
        full_spec((Lp, H)), full_spec((1, H)),          # w2 (K-padded), b2
        full_spec((H, D)), full_spec((1, D)),           # w3, b3
    ]
    out_specs = [
        pl.BlockSpec((tb, D), lambda i: (i, 0)),        # x_reconstructed
        pl.BlockSpec((tb, 2 * Lp), lambda i: (i, 0)),   # fused mu|logvar (lane-dense)
    ]
    out_shape = [
        jax.ShapeDtypeStruct((Bp, D), jnp.float32),
        jax.ShapeDtypeStruct((Bp, 2 * Lp), jnp.float32),
    ]

    flops = 2 * Bp * (D * H + H * 2 * Lp + Lp * H + H * D)
    transcendentals = Bp * (Lp + D)                    # exp(0.5*logvar) + sigmoid
    bytes_accessed = (
        Bp * D * 4 + Bp * Lp * 4                                    # x, eps
        + 2 * (D * H + H * 2 * Lp + Lp * H + H * D)                 # bf16 weights
        + 4 * (H + 2 * Lp + H + D)                                  # f32 biases
        + Bp * D * 4 + Bp * 2 * Lp * 4                              # outputs
    )

    fn = pl.pallas_call(
        vae_kernel,
        grid_spec=pltpu.PrefetchScalarGridSpec(
            num_scalar_prefetch=0,
            grid=grid,
            in_specs=in_specs,
            out_specs=out_specs,
        ),
        out_shape=out_shape,
        compiler_params=pltpu.CompilerParams(
            dimension_semantics=("parallel",),          # batch tiles -> both v7x TCs
        ),
        cost_estimate=pl.CostEstimate(
            flops=flops,
            transcendentals=transcendentals,
            bytes_accessed=bytes_accessed,
        ),
    )
    xrec_p, mulv_p = fn(x, eps_p, w1, b1, wml, bml, w2p, b2, w3, b3)

    x_rec = xrec_p[:B]
    mu = mulv_p[:B, :L]
    logvar = mulv_p[:B, Lp:Lp + L]
    return x_rec, mu, logvar


def init_params(key, input_dim, hidden_dim, latent_dim):
    ks = jax.random.split(key, 10)

    def lin(kw, fan_in, fan_out):
        scale = 1.0 / jnp.sqrt(fan_in)
        return jax.random.uniform(kw, (fan_in, fan_out), jnp.float32, -scale, scale)

    return {
        "w1":  lin(ks[0], input_dim, hidden_dim),
        "b1":  jnp.zeros((1, hidden_dim), jnp.float32),
        "wmu": lin(ks[1], hidden_dim, latent_dim),
        "bmu": jnp.zeros((1, latent_dim), jnp.float32),
        "wlv": lin(ks[2], hidden_dim, latent_dim),
        "blv": jnp.zeros((1, latent_dim), jnp.float32),
        "w2":  lin(ks[3], latent_dim, hidden_dim),
        "b2":  jnp.zeros((1, hidden_dim), jnp.float32),
        "w3":  lin(ks[4], hidden_dim, input_dim),
        "b3":  jnp.zeros((1, input_dim), jnp.float32),
    }


def vae_ref(x, eps, p):
    """Pure-JAX reference using the same bf16-operand / f32-accumulate matmul precision."""
    bf16 = jnp.bfloat16

    def mm(a, w):
        return jnp.dot(a.astype(bf16), w.astype(bf16),
                       preferred_element_type=jnp.float32)

    h1 = jnp.maximum(mm(x, p["w1"]) + p["b1"], 0.0)
    mu = mm(h1, p["wmu"]) + p["bmu"]
    logvar = mm(h1, p["wlv"]) + p["blv"]
    z = mu + eps * jnp.exp(0.5 * logvar)
    h2 = jnp.maximum(mm(z, p["w2"]) + p["b2"], 0.0)
    x_rec = jax.nn.sigmoid(mm(h2, p["w3"]) + p["b3"])
    return x_rec, mu, logvar


if __name__ == "__main__":
    B, INPUT_DIM, HIDDEN_DIM, LATENT_DIM = 256, 256, 256, 32

    key = jax.random.PRNGKey(0)
    k_x, k_eps, k_p = jax.random.split(key, 3)

    x = jax.random.uniform(k_x, (B, INPUT_DIM), jnp.float32)      # e.g. flattened image
    eps = jax.random.normal(k_eps, (B, LATENT_DIM), jnp.float32)  # reparameterization noise
    params = init_params(k_p, INPUT_DIM, HIDDEN_DIM, LATENT_DIM)

    x_rec, mu, logvar = vae_forward(x, eps, params, tb=128)
    jax.block_until_ready((x_rec, mu, logvar))

    # sanity check against a matched-precision pure-JAX reference
    r_rec, r_mu, r_lv = vae_ref(x, eps, params)
    assert x_rec.shape == (B, INPUT_DIM)
    assert mu.shape == (B, LATENT_DIM) and logvar.shape == (B, LATENT_DIM)
    assert jnp.allclose(x_rec, r_rec, atol=1e-4, rtol=1e-4)
    assert jnp.allclose(mu, r_mu, atol=1e-4, rtol=1e-4)
    assert jnp.allclose(logvar, r_lv, atol=1e-4, rtol=1e-4)

    print("KERNEL_OK")
</pallas_src>

<mosaic_0001>
module attributes {stable_mosaic.version = 11 : i64} {
  func.func @vae_kernel(%arg0: i32, %arg1: memref<128x256xf32, #tpu.memory_space<vmem>>, %arg2: memref<128x128xf32, #tpu.memory_space<vmem>>, %arg3: memref<256x256xbf16, #tpu.memory_space<vmem>>, %arg4: memref<1x256xf32, #tpu.memory_space<vmem>>, %arg5: memref<256x256xbf16, #tpu.memory_space<vmem>>, %arg6: memref<1x256xf32, #tpu.memory_space<vmem>>, %arg7: memref<128x256xbf16, #tpu.memory_space<vmem>>, %arg8: memref<1x256xf32, #tpu.memory_space<vmem>>, %arg9: memref<256x256xbf16, #tpu.memory_space<vmem>>, %arg10: memref<1x256xf32, #tpu.memory_space<vmem>>, %arg11: memref<128x256xf32, #tpu.memory_space<vmem>>, %arg12: memref<128x256xf32, #tpu.memory_space<vmem>>) attributes {dimension_semantics = [#tpu.dimension_semantics<parallel>], iteration_bounds = array<i64: 2>, scalar_prefetch = 0 : i64, scratch_operands = 0 : i64, tpu.core_type = #tpu.core_type<tc>, window_params = [{transform_indices = @transform_0, window_bounds = array<i64: 128, 256>}, {transform_indices = @transform_1, window_bounds = array<i64: 128, 128>}, {pipeline_mode = #tpu.pipeline_mode<synchronous>, transform_indices = @transform_2, window_bounds = array<i64: 256, 256>}, {pipeline_mode = #tpu.pipeline_mode<synchronous>, transform_indices = @transform_3, window_bounds = array<i64: 1, 256>}, {pipeline_mode = #tpu.pipeline_mode<synchronous>, transform_indices = @transform_4, window_bounds = array<i64: 256, 256>}, {pipeline_mode = #tpu.pipeline_mode<synchronous>, transform_indices = @transform_5, window_bounds = array<i64: 1, 256>}, {pipeline_mode = #tpu.pipeline_mode<synchronous>, transform_indices = @transform_6, window_bounds = array<i64: 128, 256>}, {pipeline_mode = #tpu.pipeline_mode<synchronous>, transform_indices = @transform_7, window_bounds = array<i64: 1, 256>}, {pipeline_mode = #tpu.pipeline_mode<synchronous>, transform_indices = @transform_8, window_bounds = array<i64: 256, 256>}, {pipeline_mode = #tpu.pipeline_mode<synchronous>, transform_indices = @transform_9, window_bounds = array<i64: 1, 256>}, {transform_indices = @transform_10, window_bounds = array<i64: 128, 256>}, {transform_indices = @transform_11, window_bounds = array<i64: 128, 256>}]} {
    %c0 = arith.constant 0 : index
    %c0_0 = arith.constant 0 : index
    %0 = vector.load %arg1[%c0, %c0_0] : memref<128x256xf32, #tpu.memory_space<vmem>>, vector<128x256xf32>
    %1 = arith.truncf %0 : vector<128x256xf32> to vector<128x256xbf16>
    %c0_1 = arith.constant 0 : index
    %c0_2 = arith.constant 0 : index
    %2 = vector.load %arg3[%c0_1, %c0_2] : memref<256x256xbf16, #tpu.memory_space<vmem>>, vector<256x256xbf16>
    %cst = arith.constant dense<0.000000e+00> : vector<128x256xf32>
    %3 = tpu.matmul %1, %2, %cst {dimension_numbers = #tpu.dot_dimension_numbers<[1], [0], [0], [1], [0, 0, 1, 1], [], []>} : vector<128x256xbf16>, vector<256x256xbf16>, vector<128x256xf32> -> vector<128x256xf32>
    %c0_3 = arith.constant 0 : index
    %c0_4 = arith.constant 0 : index
    %4 = vector.load %arg4[%c0_3, %c0_4] : memref<1x256xf32, #tpu.memory_space<vmem>>, vector<1x256xf32>
    %5 = vector.broadcast %4 : vector<1x256xf32> to vector<128x256xf32>
    %6 = arith.addf %3, %5 : vector<128x256xf32>
    %cst_5 = arith.constant 0.000000e+00 : f32
    %7 = vector.broadcast %cst_5 : f32 to vector<128x256xf32>
    %8 = arith.maximumf %6, %7 : vector<128x256xf32>
    %9 = arith.truncf %8 : vector<128x256xf32> to vector<128x256xbf16>
    %c0_6 = arith.constant 0 : index
    %c0_7 = arith.constant 0 : index
    %10 = vector.load %arg5[%c0_6, %c0_7] : memref<256x256xbf16, #tpu.memory_space<vmem>>, vector<256x256xbf16>
    %cst_8 = arith.constant dense<0.000000e+00> : vector<128x256xf32>
    %11 = tpu.matmul %9, %10, %cst_8 {dimension_numbers = #tpu.dot_dimension_numbers<[1], [0], [0], [1], [0, 0, 1, 1], [], []>} : vector<128x256xbf16>, vector<256x256xbf16>, vector<128x256xf32> -> vector<128x256xf32>
    %c0_9 = arith.constant 0 : index
    %c0_10 = arith.constant 0 : index
    %12 = vector.load %arg6[%c0_9, %c0_10] : memref<1x256xf32, #tpu.memory_space<vmem>>, vector<1x256xf32>
    %13 = vector.broadcast %12 : vector<1x256xf32> to vector<128x256xf32>
    %14 = arith.addf %11, %13 : vector<128x256xf32>
    %c0_11 = arith.constant 0 : index
    %c0_12 = arith.constant 0 : index
    %15 = vector.load %arg12[%c0_11, %c0_12] : memref<128x256xf32, #tpu.memory_space<vmem>>, vector<128x256xf32>
    tpu.vector_store %arg12[%c0_11, %c0_12], %14 {strides = array<i32>} : memref<128x256xf32, #tpu.memory_space<vmem>>, vector<128x256xf32>,
    %16 = vector.extract_strided_slice %14 {offsets = [0, 0], sizes = [128, 128], strides = [1, 1]} : vector<128x256xf32> to vector<128x128xf32>
    %17 = vector.extract_strided_slice %14 {offsets = [0, 128], sizes = [128, 128], strides = [1, 1]} : vector<128x256xf32> to vector<128x128xf32>
    %c0_13 = arith.constant 0 : index
    %c0_14 = arith.constant 0 : index
    %18 = vector.load %arg2[%c0_13, %c0_14] : memref<128x128xf32, #tpu.memory_space<vmem>>, vector<128x128xf32>
    %cst_15 = arith.constant 5.000000e-01 : f32
    %19 = vector.broadcast %cst_15 : f32 to vector<128x128xf32>
    %20 = arith.mulf %19, %17 : vector<128x128xf32>
    %21 = math.exp %20 : vector<128x128xf32>
    %22 = arith.mulf %18, %21 : vector<128x128xf32>
    %23 = arith.addf %16, %22 : vector<128x128xf32>
    %24 = arith.truncf %23 : vector<128x128xf32> to vector<128x128xbf16>
    %c0_16 = arith.constant 0 : index
    %c0_17 = arith.constant 0 : index
    %25 = vector.load %arg7[%c0_16, %c0_17] : memref<128x256xbf16, #tpu.memory_space<vmem>>, vector<128x256xbf16>
    %cst_18 = arith.constant dense<0.000000e+00> : vector<128x256xf32>
    %26 = tpu.matmul %24, %25, %cst_18 {dimension_numbers = #tpu.dot_dimension_numbers<[1], [0], [0], [1], [0, 0, 1, 1], [], []>} : vector<128x128xbf16>, vector<128x256xbf16>, vector<128x256xf32> -> vector<128x256xf32>
    %c0_19 = arith.constant 0 : index
    %c0_20 = arith.constant 0 : index
    %27 = vector.load %arg8[%c0_19, %c0_20] : memref<1x256xf32, #tpu.memory_space<vmem>>, vector<1x256xf32>
    %28 = vector.broadcast %27 : vector<1x256xf32> to vector<128x256xf32>
    %29 = arith.addf %26, %28 : vector<128x256xf32>
    %cst_21 = arith.constant 0.000000e+00 : f32
    %30 = vector.broadcast %cst_21 : f32 to vector<128x256xf32>
    %31 = arith.maximumf %29, %30 : vector<128x256xf32>
    %32 = arith.truncf %31 : vector<128x256xf32> to vector<128x256xbf16>
    %c0_22 = arith.constant 0 : index
    %c0_23 = arith.constant 0 : index
    %33 = vector.load %arg9[%c0_22, %c0_23] : memref<256x256xbf16, #tpu.memory_space<vmem>>, vector<256x256xbf16>
    %cst_24 = arith.constant dense<0.000000e+00> : vector<128x256xf32>
    %34 = tpu.matmul %32, %33, %cst_24 {dimension_numbers = #tpu.dot_dimension_numbers<[1], [0], [0], [1], [0, 0, 1, 1], [], []>} : vector<128x256xbf16>, vector<256x256xbf16>, vector<128x256xf32> -> vector<128x256xf32>
    %c0_25 = arith.constant 0 : index
    %c0_26 = arith.constant 0 : index
    %35 = vector.load %arg10[%c0_25, %c0_26] : memref<1x256xf32, #tpu.memory_space<vmem>>, vector<1x256xf32>
    %36 = vector.broadcast %35 : vector<1x256xf32> to vector<128x256xf32>
    %37 = arith.addf %34, %36 : vector<128x256xf32>
    %38 = arith.negf %37 : vector<128x256xf32>
    %39 = math.exp %38 : vector<128x256xf32>
    %cst_27 = arith.constant 1.000000e+00 : f32
    %40 = vector.broadcast %cst_27 : f32 to vector<128x256xf32>
    %41 = arith.addf %40, %39 : vector<128x256xf32>
    %42 = arith.divf %40, %41 : vector<128x256xf32>
    %c0_28 = arith.constant 0 : index
    %c0_29 = arith.constant 0 : index
    %43 = vector.load %arg11[%c0_28, %c0_29] : memref<128x256xf32, #tpu.memory_space<vmem>>, vector<128x256xf32>
    tpu.vector_store %arg11[%c0_28, %c0_29], %42 {strides = array<i32>} : memref<128x256xf32, #tpu.memory_space<vmem>>, vector<128x256xf32>,
    return
  }
  func.func @transform_0(%arg0: i32) -> (i32, i32) {
    %c0_i32 = arith.constant 0 : i32
    %c0_i32_0 = arith.constant 0 : i32
    return %arg0, %c0_i32 : i32, i32
  }
  func.func @transform_1(%arg0: i32) -> (i32, i32) {
    %c0_i32 = arith.constant 0 : i32
    %c0_i32_0 = arith.constant 0 : i32
    return %arg0, %c0_i32 : i32, i32
  }
  func.func @transform_2(%arg0: i32) -> (i32, i32) {
    %c0_i32 = arith.constant 0 : i32
    %c0_i32_0 = arith.constant 0 : i32
    %c0_i32_1 = arith.constant 0 : i32
    return %c0_i32, %c0_i32_0 : i32, i32
  }
  func.func @transform_3(%arg0: i32) -> (i32, i32) {
    %c0_i32 = arith.constant 0 : i32
    %c0_i32_0 = arith.constant 0 : i32
    %c0_i32_1 = arith.constant 0 : i32
    return %c0_i32, %c0_i32_0 : i32, i32
  }
  func.func @transform_4(%arg0: i32) -> (i32, i32) {
    %c0_i32 = arith.constant 0 : i32
    %c0_i32_0 = arith.constant 0 : i32
    %c0_i32_1 = arith.constant 0 : i32
    return %c0_i32, %c0_i32_0 : i32, i32
  }
  func.func @transform_5(%arg0: i32) -> (i32, i32) {
    %c0_i32 = arith.constant 0 : i32
    %c0_i32_0 = arith.constant 0 : i32
    %c0_i32_1 = arith.constant 0 : i32
    return %c0_i32, %c0_i32_0 : i32, i32
  }
  func.func @transform_6(%arg0: i32) -> (i32, i32) {
    %c0_i32 = arith.constant 0 : i32
    %c0_i32_0 = arith.constant 0 : i32
    %c0_i32_1 = arith.constant 0 : i32
    return %c0_i32, %c0_i32_0 : i32, i32
  }
  func.func @transform_7(%arg0: i32) -> (i32, i32) {
    %c0_i32 = arith.constant 0 : i32
    %c0_i32_0 = arith.constant 0 : i32
    %c0_i32_1 = arith.constant 0 : i32
    return %c0_i32, %c0_i32_0 : i32, i32
  }
  func.func @transform_8(%arg0: i32) -> (i32, i32) {
    %c0_i32 = arith.constant 0 : i32
    %c0_i32_0 = arith.constant 0 : i32
    %c0_i32_1 = arith.constant 0 : i32
    return %c0_i32, %c0_i32_0 : i32, i32
  }
  func.func @transform_9(%arg0: i32) -> (i32, i32) {
    %c0_i32 = arith.constant 0 : i32
    %c0_i32_0 = arith.constant 0 : i32
    %c0_i32_1 = arith.constant 0 : i32
    return %c0_i32, %c0_i32_0 : i32, i32
  }
  func.func @transform_10(%arg0: i32) -> (i32, i32) {
    %c0_i32 = arith.constant 0 : i32
    %c0_i32_0 = arith.constant 0 : i32
    return %arg0, %c0_i32 : i32, i32
  }
  func.func @transform_11(%arg0: i32) -> (i32, i32) {
    %c0_i32 = arith.constant 0 : i32
    %c0_i32_0 = arith.constant 0 : i32
    return %arg0, %c0_i32 : i32, i32
  }
}

</mosaic_0001>

<llo_original>
// kernel: tpu_custom_call.1
$region0: #{tpu_custom_call.1}
  #allocation0 [shape = 'u32[]', space=smem, size = 0x4, offset = 0x4, fixed_abs, tag = 'smem constant byte address 0x4 - core index']
  #allocation1 [shape = 'u32[144,128]{1,0:T(1,128)}', space=vmem, size = 0x12000, scoped, tag = 'internal scratch']
  %s0 = inlined_call_operand.hbm [shape: f32[256,256], index: 0, kind: input, shape index: {}]
  %s1 = inlined_call_operand.hbm [shape: f32[256,128], index: 1, kind: input, shape index: {}]
  %s2 = inlined_call_operand.hbm [shape: bf16[256,256], index: 2, kind: input, shape index: {}]
  %s3 = inlined_call_operand.vmem [shape: f32[1,256], index: 3, kind: input, shape index: {}]
  %s4 = inlined_call_operand.hbm [shape: bf16[256,256], index: 4, kind: input, shape index: {}]
  %s5 = inlined_call_operand.vmem [shape: f32[1,256], index: 5, kind: input, shape index: {}]
  %s6 = inlined_call_operand.hbm [shape: bf16[128,256], index: 6, kind: input, shape index: {}]
  %s7 = inlined_call_operand.vmem [shape: f32[1,256], index: 7, kind: input, shape index: {}]
  %s8 = inlined_call_operand.hbm [shape: bf16[256,256], index: 8, kind: input, shape index: {}]
  %s9 = inlined_call_operand.vmem [shape: f32[1,256], index: 9, kind: input, shape index: {}]
  %s10 = inlined_call_operand.hbm [shape: f32[256,256], index: 10, kind: output, shape index: {0}]
  %s11 = inlined_call_operand.hbm [shape: f32[256,256], index: 11, kind: output, shape index: {1}]
  %12 = xla_tuple %s10, %s11
  %s13 = sld [smem:[#allocation0]]
  $region105: #{tpu_custom_call.1} parent=0
    _
  %s15 = ssub.s32 1, %s13
  %s16 = scalar_select 0, %s15, %s13
  $region1: #{tpu_custom_call.1} parent=0
    #allocation2 [shape = 'u8[262144]{0}', space=vmem, size = 0x40000, scoped, tag = 'input window, operand 0']
    #allocation3 [shape = 's32[2]{0}', space=sflag, size = 0x8, scoped, tag = 'scoped memory for tpu_custom_call.1']
    #allocation4 [shape = 's32[2]{0}', space=sflag, size = 0x8, scoped, tag = 'scoped memory for tpu_custom_call.1']
    #allocation5 [shape = 'u8[131072]{0}', space=vmem, size = 0x20000, scoped, tag = 'input window, operand 1']
    #allocation6 [shape = 's32[2]{0}', space=sflag, size = 0x8, scoped, tag = 'scoped memory for tpu_custom_call.1']
    #allocation7 [shape = 'u8[131072]{0}', space=vmem, size = 0x20000, scoped, tag = 'input window, operand 2, single buffered']
    #allocation8 [shape = 'u8[131072]{0}', space=vmem, size = 0x20000, scoped, tag = 'input window, operand 4, single buffered']
    #allocation9 [shape = 's32[1]{0}', space=sflag, size = 0x4, scoped, tag = 'scoped memory for tpu_custom_call.1']
    #allocation10 [shape = 'u8[65536]{0}', space=vmem, size = 0x10000, scoped, tag = 'input window, operand 6, single buffered']
    #allocation11 [shape = 'u8[131072]{0}', space=vmem, size = 0x20000, scoped, tag = 'input window, operand 8, single buffered']
    #allocation12 [shape = 's32[1]{0}', space=sflag, size = 0x4, scoped, tag = 'scoped memory for tpu_custom_call.1']
    #allocation13 [shape = 'u8[262144]{0}', space=vmem, size = 0x40000, scoped, tag = 'output window, operand 0']
    #allocation14 [shape = 'u8[262144]{0}', space=vmem, size = 0x40000, scoped, tag = 'output window, operand 1']
    #allocation15 [shape = 's32[2]{0}', space=sflag, size = 0x8, scoped, tag = 'scoped memory for tpu_custom_call.1']
    %17 = vsyncpa [#allocation3], 0
    %s18 = scalar_lea.sflag [#allocation3], 1
    %19 = vsyncpa %s18, 0
    %20 = vsyncpa [#allocation6], 0
    %s21 = scalar_lea.sflag [#allocation6], 1
    %22 = vsyncpa %s21, 0
    %23 = vsyncpa [#allocation9], 0
    %24 = vsyncpa [#allocation12], 0
    %25 = vsyncpa [#allocation4], 0
    %s26 = scalar_lea.sflag [#allocation4], 1
    %27 = vsyncpa %s26, 0
    %28 = vsyncpa [#allocation15], 0
    %s29 = scalar_lea.sflag [#allocation15], 1
    %30 = vsyncpa %s29, 0
    loop: start=0, step=1, limit=4
    $region2: #{tpu_custom_call.1} parent=1 // loop_pre_header
      _
    $region3: #{tpu_custom_call.1} parent=1 // loop_header
      %s32 = sphi 0, %s36
      %p33 = scmp.ge.s32.totalorder %s32, 4
      %s42 = sphi 0, %s44
      %s45 = sphi 0, %s42
      %s46 = sphi 0, %s45
      %s62 = sphi 0, %s46
      %s68 = sphi 0, %s70
      %s71 = sphi 0, %s68
      %s72 = sphi 0, %s71
      %s88 = sphi 0, %s72
      %s92 = sphi 0, %s92
      %s94 = sphi 0, %s92
      %s95 = sphi 0, %s94
      %s109 = sphi 0, %s95
      %s113 = sphi 0, %s113
      %s115 = sphi 0, %s113
      %s116 = sphi 0, %s115
      %s130 = sphi 0, %s116
      %s134 = sphi 0, %s134
      %s136 = sphi 0, %s134
      %s137 = sphi 0, %s136
      %s151 = sphi 0, %s137
      %s155 = sphi 0, %s155
      %s157 = sphi 0, %s155
      %s158 = sphi 0, %s157
      %s172 = sphi 0, %s158
      %s176 = sphi 0, %s176
      %s178 = sphi 0, %s176
      %s179 = sphi 0, %s178
      %s193 = sphi 0, %s179
      %s197 = sphi 0, %s197
      %s199 = sphi 0, %s197
      %s200 = sphi 0, %s199
      %s214 = sphi 0, %s200
      %s218 = sphi 0, %s218
      %s220 = sphi 0, %s218
      %s221 = sphi 0, %s220
      %s235 = sphi 0, %s221
      %s239 = sphi 0, %s239
      %s241 = sphi 0, %s239
      %s242 = sphi 0, %s241
      %s256 = sphi 0, %s242
      %s262 = sphi 0, %s264
      %s265 = sphi 0, %s262
      %s266 = sphi 0, %s265
      %s282 = sphi 0, %s266
      %s288 = sphi 0, %s290
      %s291 = sphi 0, %s288
      %s292 = sphi 0, %s291
      %s308 = sphi 0, %s292
    $region4: #{tpu_custom_call.1} parent=1 // loop_header_branch
      %35 = sbr.rel (%p33) target = $region8
    $region5: #{tpu_custom_call.1} parent=1 // loop_body
      %s37 = ssub.s32 %s32, 1
      %s38 = ssub.s32 %s32, 2
      %s39 = sadd.s32 %s32, 1
      %s40 = ssub.s32 %s32, %s39
      %p41 = scmp.eq.s32.totalorder %s40, 0
      %s43 = sadd.s32 %s42, 1
      %s44 = scalar_select %p41, %s42, %s43
      %p47 = pneg %p41
      %p48 = scmp.eq.s32.totalorder %s32, 1
      %p49 = por %p47, %p48
      %p50 = scmp.ne.s32.totalorder %s42, %s45
      %p51 = scmp.eq.s32.totalorder %s32, 0
      %p52 = por %p50, %p51
      %p53 = scmp.ne.s32.totalorder %s42, %s45
      %p54 = scmp.eq.s32.totalorder %s37, 1
      %p55 = por %p53, %p54
      %p56 = scmp.ne.s32.totalorder %s45, %s46
      %p57 = scmp.eq.s32.totalorder %s37, 0
      %p58 = por %p56, %p57
      %p59 = scmp.ne.s32.totalorder %s45, %s46
      %p60 = scmp.eq.s32.totalorder %s38, 1
      %p61 = por %p59, %p60
      %p63 = scmp.ne.s32.totalorder %s46, %s62
      %p64 = scmp.eq.s32.totalorder %s38, 0
      %p65 = por %p63, %p64
      %s66 = ssub.s32 %s32, %s39
      %p67 = scmp.eq.s32.totalorder %s66, 0
      %s69 = sadd.s32 %s68, 1
      %s70 = scalar_select %p67, %s68, %s69
      %p73 = pneg %p67
      %p74 = scmp.eq.s32.totalorder %s32, 1
      %p75 = por %p73, %p74
      %p76 = scmp.ne.s32.totalorder %s68, %s71
      %p77 = scmp.eq.s32.totalorder %s32, 0
      %p78 = por %p76, %p77
      %p79 = scmp.ne.s32.totalorder %s68, %s71
      %p80 = scmp.eq.s32.totalorder %s37, 1
      %p81 = por %p79, %p80
      %p82 = scmp.ne.s32.totalorder %s71, %s72
      %p83 = scmp.eq.s32.totalorder %s37, 0
      %p84 = por %p82, %p83
      %p85 = scmp.ne.s32.totalorder %s71, %s72
      %p86 = scmp.eq.s32.totalorder %s38, 1
      %p87 = por %p85, %p86
      %p89 = scmp.ne.s32.totalorder %s72, %s88
      %p90 = scmp.eq.s32.totalorder %s38, 0
      %p91 = por %p89, %p90
      %s93 = sadd.s32 %s92, 1
      %p96 = scmp.eq.s32.totalorder %s32, 1
      %p97 = scmp.ne.s32.totalorder %s92, %s94
      %p98 = scmp.eq.s32.totalorder %s32, 0
      %p99 = por %p97, %p98
      %p100 = scmp.ne.s32.totalorder %s92, %s94
      %p101 = scmp.eq.s32.totalorder %s37, 1
      %p102 = por %p100, %p101
      %p103 = scmp.ne.s32.totalorder %s94, %s95
      %p104 = scmp.eq.s32.totalorder %s37, 0
      %p105 = por %p103, %p104
      %p106 = scmp.ne.s32.totalorder %s94, %s95
      %p107 = scmp.eq.s32.totalorder %s38, 1
      %p108 = por %p106, %p107
      %p110 = scmp.ne.s32.totalorder %s95, %s109
      %p111 = scmp.eq.s32.totalorder %s38, 0
      %p112 = por %p110, %p111
      %s114 = sadd.s32 %s113, 1
      %p117 = scmp.eq.s32.totalorder %s32, 1
      %p118 = scmp.ne.s32.totalorder %s113, %s115
      %p119 = scmp.eq.s32.totalorder %s32, 0
      %p120 = por %p118, %p119
      %p121 = scmp.ne.s32.totalorder %s113, %s115
      %p122 = scmp.eq.s32.totalorder %s37, 1
      %p123 = por %p121, %p122
      %p124 = scmp.ne.s32.totalorder %s115, %s116
      %p125 = scmp.eq.s32.totalorder %s37, 0
      %p126 = por %p124, %p125
      %p127 = scmp.ne.s32.totalorder %s115, %s116
      %p128 = scmp.eq.s32.totalorder %s38, 1
      %p129 = por %p127, %p128
      %p131 = scmp.ne.s32.totalorder %s116, %s130
      %p132 = scmp.eq.s32.totalorder %s38, 0
      %p133 = por %p131, %p132
      %s135 = sadd.s32 %s134, 1
      %p138 = scmp.eq.s32.totalorder %s32, 1
      %p139 = scmp.ne.s32.totalorder %s134, %s136
      %p140 = scmp.eq.s32.totalorder %s32, 0
      %p141 = por %p139, %p140
      %p142 = scmp.ne.s32.totalorder %s134, %s136
      %p143 = scmp.eq.s32.totalorder %s37, 1
      %p144 = por %p142, %p143
      %p145 = scmp.ne.s32.totalorder %s136, %s137
      %p146 = scmp.eq.s32.totalorder %s37, 0
      %p147 = por %p145, %p146
      %p148 = scmp.ne.s32.totalorder %s136, %s137
      %p149 = scmp.eq.s32.totalorder %s38, 1
      %p150 = por %p148, %p149
      %p152 = scmp.ne.s32.totalorder %s137, %s151
      %p153 = scmp.eq.s32.totalorder %s38, 0
      %p154 = por %p152, %p153
      %s156 = sadd.s32 %s155, 1
      %p159 = scmp.eq.s32.totalorder %s32, 1
      %p160 = scmp.ne.s32.totalorder %s155, %s157
      %p161 = scmp.eq.s32.totalorder %s32, 0
      %p162 = por %p160, %p161
      %p163 = scmp.ne.s32.totalorder %s155, %s157
      %p164 = scmp.eq.s32.totalorder %s37, 1
      %p165 = por %p163, %p164
      %p166 = scmp.ne.s32.totalorder %s157, %s158
      %p167 = scmp.eq.s32.totalorder %s37, 0
      %p168 = por %p166, %p167
      %p169 = scmp.ne.s32.totalorder %s157, %s158
      %p170 = scmp.eq.s32.totalorder %s38, 1
      %p171 = por %p169, %p170
      %p173 = scmp.ne.s32.totalorder %s158, %s172
      %p174 = scmp.eq.s32.totalorder %s38, 0
      %p175 = por %p173, %p174
      %s177 = sadd.s32 %s176, 1
      %p180 = scmp.eq.s32.totalorder %s32, 1
      %p181 = scmp.ne.s32.totalorder %s176, %s178
      %p182 = scmp.eq.s32.totalorder %s32, 0
      %p183 = por %p181, %p182
      %p184 = scmp.ne.s32.totalorder %s176, %s178
      %p185 = scmp.eq.s32.totalorder %s37, 1
      %p186 = por %p184, %p185
      %p187 = scmp.ne.s32.totalorder %s178, %s179
      %p188 = scmp.eq.s32.totalorder %s37, 0
      %p189 = por %p187, %p188
      %p190 = scmp.ne.s32.totalorder %s178, %s179
      %p191 = scmp.eq.s32.totalorder %s38, 1
      %p192 = por %p190, %p191
      %p194 = scmp.ne.s32.totalorder %s179, %s193
      %p195 = scmp.eq.s32.totalorder %s38, 0
      %p196 = por %p194, %p195
      %s198 = sadd.s32 %s197, 1
      %p201 = scmp.eq.s32.totalorder %s32, 1
      %p202 = scmp.ne.s32.totalorder %s197, %s199
      %p203 = scmp.eq.s32.totalorder %s32, 0
      %p204 = por %p202, %p203
      %p205 = scmp.ne.s32.totalorder %s197, %s199
      %p206 = scmp.eq.s32.totalorder %s37, 1
      %p207 = por %p205, %p206
      %p208 = scmp.ne.s32.totalorder %s199, %s200
      %p209 = scmp.eq.s32.totalorder %s37, 0
      %p210 = por %p208, %p209
      %p211 = scmp.ne.s32.totalorder %s199, %s200
      %p212 = scmp.eq.s32.totalorder %s38, 1
      %p213 = por %p211, %p212
      %p215 = scmp.ne.s32.totalorder %s200, %s214
      %p216 = scmp.eq.s32.totalorder %s38, 0
      %p217 = por %p215, %p216
      %s219 = sadd.s32 %s218, 1
      %p222 = scmp.eq.s32.totalorder %s32, 1
      %p223 = scmp.ne.s32.totalorder %s218, %s220
      %p224 = scmp.eq.s32.totalorder %s32, 0
      %p225 = por %p223, %p224
      %p226 = scmp.ne.s32.totalorder %s218, %s220
      %p227 = scmp.eq.s32.totalorder %s37, 1
      %p228 = por %p226, %p227
      %p229 = scmp.ne.s32.totalorder %s220, %s221
      %p230 = scmp.eq.s32.totalorder %s37, 0
      %p231 = por %p229, %p230
      %p232 = scmp.ne.s32.totalorder %s220, %s221
      %p233 = scmp.eq.s32.totalorder %s38, 1
      %p234 = por %p232, %p233
      %p236 = scmp.ne.s32.totalorder %s221, %s235
      %p237 = scmp.eq.s32.totalorder %s38, 0
      %p238 = por %p236, %p237
      %s240 = sadd.s32 %s239, 1
      %p243 = scmp.eq.s32.totalorder %s32, 1
      %p244 = scmp.ne.s32.totalorder %s239, %s241
      %p245 = scmp.eq.s32.totalorder %s32, 0
      %p246 = por %p244, %p245
      %p247 = scmp.ne.s32.totalorder %s239, %s241
      %p248 = scmp.eq.s32.totalorder %s37, 1
      %p249 = por %p247, %p248
      %p250 = scmp.ne.s32.totalorder %s241, %s242
      %p251 = scmp.eq.s32.totalorder %s37, 0
      %p252 = por %p250, %p251
      %p253 = scmp.ne.s32.totalorder %s241, %s242
      %p254 = scmp.eq.s32.totalorder %s38, 1
      %p255 = por %p253, %p254
      %p257 = scmp.ne.s32.totalorder %s242, %s256
      %p258 = scmp.eq.s32.totalorder %s38, 0
      %p259 = por %p257, %p258
      %s260 = ssub.s32 %s32, %s39
      %p261 = scmp.eq.s32.totalorder %s260, 0
      %s263 = sadd.s32 %s262, 1
      %s264 = scalar_select %p261, %s262, %s263
      %p267 = pneg %p261
      %p268 = scmp.eq.s32.totalorder %s32, 1
      %p269 = por %p267, %p268
      %p270 = scmp.ne.s32.totalorder %s262, %s265
      %p271 = scmp.eq.s32.totalorder %s32, 0
      %p272 = por %p270, %p271
      %p273 = scmp.ne.s32.totalorder %s262, %s265
      %p274 = scmp.eq.s32.totalorder %s37, 1
      %p275 = por %p273, %p274
      %p276 = scmp.ne.s32.totalorder %s265, %s266
      %p277 = scmp.eq.s32.totalorder %s37, 0
      %p278 = por %p276, %p277
      %p279 = scmp.ne.s32.totalorder %s265, %s266
      %p280 = scmp.eq.s32.totalorder %s38, 1
      %p281 = por %p279, %p280
      %p283 = scmp.ne.s32.totalorder %s266, %s282
      %p284 = scmp.eq.s32.totalorder %s38, 0
      %p285 = por %p283, %p284
      %s286 = ssub.s32 %s32, %s39
      %p287 = scmp.eq.s32.totalorder %s286, 0
      %s289 = sadd.s32 %s288, 1
      %s290 = scalar_select %p287, %s288, %s289
      %p293 = pneg %p287
      %p294 = scmp.eq.s32.totalorder %s32, 1
      %p295 = por %p293, %p294
      %p296 = scmp.ne.s32.totalorder %s288, %s291
      %p297 = scmp.eq.s32.totalorder %s32, 0
      %p298 = por %p296, %p297
      %p299 = scmp.ne.s32.totalorder %s288, %s291
      %p300 = scmp.eq.s32.totalorder %s37, 1
      %p301 = por %p299, %p300
      %p302 = scmp.ne.s32.totalorder %s291, %s292
      %p303 = scmp.eq.s32.totalorder %s37, 0
      %p304 = por %p302, %p303
      %p305 = scmp.ne.s32.totalorder %s291, %s292
      %p306 = scmp.eq.s32.totalorder %s38, 1
      %p307 = por %p305, %p306
      %p309 = scmp.ne.s32.totalorder %s292, %s308
      %p310 = scmp.eq.s32.totalorder %s38, 0
      %p311 = por %p309, %p310
      %p312 = scmp.le.s32.totalorder 1, %s32
      %p313 = scmp.lt.s32.totalorder %s32, 3
      %p314 = pnand %p312, %p313
      %p315 = pneg %p314
      // Predicated region
      $region9: #{tpu_custom_call.1} parent=5 // pred_check
        _
      $region10: #{tpu_custom_call.1} parent=5 // pred_check_branch
        %317 = sbr.rel (%p314) target = $region12
      $region11: #{tpu_custom_call.1} parent=5 // pred_region
        %s318 = ssub.s32 %s32, 1
        // Predicated region
        $region13: #{tpu_custom_call.1} parent=11 // pred_check
          %p319 = pneg %p105
        $region14: #{tpu_custom_call.1} parent=11 // pred_check_branch
          %321 = sbr.rel (%p319) target = $region16
        $region15: #{tpu_custom_call.1} parent=11 // pred_region
          %s323 = ssub.s32 4096, 4096
          %324 = vsyncadd [#allocation6], %s323
          %s325 = sshll.u32 [#allocation7], 4
          %s326 = int_to_ptr.vmem [resolvable:$true] %s325
          %331 = dma.hbm_to_vmem [thread:$0]  %s2, 4096, %s326, [#allocation6], 128, 128, 8
        $region16: #{tpu_custom_call.1} parent=11 // pred_fallthru
          _
        // Predicated region
        $region17: #{tpu_custom_call.1} parent=11 // pred_check
          %p332 = pneg %p126
        $region18: #{tpu_custom_call.1} parent=11 // pred_check_branch
          %334 = sbr.rel (%p332) target = $region20
        $region19: #{tpu_custom_call.1} parent=11 // pred_region
          _
        $region20: #{tpu_custom_call.1} parent=11 // pred_fallthru
          _
        // Predicated region
        $region21: #{tpu_custom_call.1} parent=11 // pred_check
          %p335 = pneg %p147
        $region22: #{tpu_custom_call.1} parent=11 // pred_check_branch
          %337 = sbr.rel (%p335) target = $region24
        $region23: #{tpu_custom_call.1} parent=11 // pred_region
          %s339 = ssub.s32 4096, 4096
          %340 = vsyncadd [#allocation9], %s339
          %s341 = sshll.u32 [#allocation8], 4
          %s342 = int_to_ptr.vmem [resolvable:$true] %s341
          %347 = dma.hbm_to_vmem [thread:$0]  %s4, 4096, %s342, [#allocation9], 128, 128, 8
        $region24: #{tpu_custom_call.1} parent=11 // pred_fallthru
          _
        // Predicated region
        $region25: #{tpu_custom_call.1} parent=11 // pred_check
          %p348 = pneg %p168
        $region26: #{tpu_custom_call.1} parent=11 // pred_check_branch
          %350 = sbr.rel (%p348) target = $region28
        $region27: #{tpu_custom_call.1} parent=11 // pred_region
          _
        $region28: #{tpu_custom_call.1} parent=11 // pred_fallthru
          _
        // Predicated region
        $region29: #{tpu_custom_call.1} parent=11 // pred_check
          %p351 = pneg %p189
        $region30: #{tpu_custom_call.1} parent=11 // pred_check_branch
          %353 = sbr.rel (%p351) target = $region32
        $region31: #{tpu_custom_call.1} parent=11 // pred_region
          %s355 = ssub.s32 2048, 2048
          %356 = vsyncadd [#allocation9], %s355
          %s357 = sshll.u32 [#allocation10], 4
          %s358 = int_to_ptr.vmem [resolvable:$true] %s357
          %363 = dma.hbm_to_vmem [thread:$0]  %s6, 2048, %s358, [#allocation9], 128, 128, 8
        $region32: #{tpu_custom_call.1} parent=11 // pred_fallthru
          _
        // Predicated region
        $region33: #{tpu_custom_call.1} parent=11 // pred_check
          %p364 = pneg %p210
        $region34: #{tpu_custom_call.1} parent=11 // pred_check_branch
          %366 = sbr.rel (%p364) target = $region36
        $region35: #{tpu_custom_call.1} parent=11 // pred_region
          _
        $region36: #{tpu_custom_call.1} parent=11 // pred_fallthru
          _
        // Predicated region
        $region37: #{tpu_custom_call.1} parent=11 // pred_check
          %p367 = pneg %p231
        $region38: #{tpu_custom_call.1} parent=11 // pred_check_branch
          %369 = sbr.rel (%p367) target = $region40
        $region39: #{tpu_custom_call.1} parent=11 // pred_region
          %s371 = ssub.s32 4096, 4096
          %372 = vsyncadd [#allocation12], %s371
          %s373 = sshll.u32 [#allocation11], 4
          %s374 = int_to_ptr.vmem [resolvable:$true] %s373
          %379 = dma.hbm_to_vmem [thread:$0]  %s8, 4096, %s374, [#allocation12], 128, 128, 8
        $region40: #{tpu_custom_call.1} parent=11 // pred_fallthru
          _
        // Predicated region
        $region41: #{tpu_custom_call.1} parent=11 // pred_check
          %p380 = pneg %p252
        $region42: #{tpu_custom_call.1} parent=11 // pred_check_branch
          %382 = sbr.rel (%p380) target = $region44
        $region43: #{tpu_custom_call.1} parent=11 // pred_region
          _
        $region44: #{tpu_custom_call.1} parent=11 // pred_fallthru
          _
      $region12: #{tpu_custom_call.1} parent=5 // pred_fallthru
        _
      %p383 = scmp.lt.s32.totalorder %s32, 2
      // Predicated region
      $region45: #{tpu_custom_call.1} parent=5 // pred_check
        %p384 = pneg %p383
      $region46: #{tpu_custom_call.1} parent=5 // pred_check_branch
        %386 = sbr.rel (%p384) target = $region48
      $region47: #{tpu_custom_call.1} parent=5 // pred_region
        // Predicated region
        $region49: #{tpu_custom_call.1} parent=47 // pred_check
          %p387 = pneg %p52
        $region50: #{tpu_custom_call.1} parent=47 // pred_check_branch
          %389 = sbr.rel (%p387) target = $region52
        $region51: #{tpu_custom_call.1} parent=47 // pred_region
          %s390 = sand.u32 %s42, 1
          %s391 = scalar_lea.sflag [#allocation3], %s390
          %s392 = sand.u32 %s42, 1
          %s393 = smul.addr %s392, 256
          %s394 = scalar_lea.vmem [#allocation2], %s393
          %s395 = smul.u32 16, %s32
          %s397 = ssub.s32 4096, 4096
          %398 = vsyncadd %s391, %s397
          %s399 = smul.addr %s395, 2
          %s400 = smul.addr %s399, 128
          %s401 = scalar_lea.hbm %s0, %s400
          %s402 = sshll.u32 %s394, 4
          %s403 = int_to_ptr.vmem [resolvable:$true] %s402
          %408 = dma.hbm_to_vmem [thread:$0]  %s401, 4096, %s403, %s391, 256, 256, 16
        $region52: #{tpu_custom_call.1} parent=47 // pred_fallthru
          _
        // Predicated region
        $region53: #{tpu_custom_call.1} parent=47 // pred_check
          %p409 = pneg %p78
        $region54: #{tpu_custom_call.1} parent=47 // pred_check_branch
          %411 = sbr.rel (%p409) target = $region56
        $region55: #{tpu_custom_call.1} parent=47 // pred_region
          %s412 = sand.u32 %s32, 1
          %s413 = scalar_lea.sflag [#allocation6], %s412
          %s414 = sand.u32 %s68, 1
          %s415 = smul.addr %s414, 128
          %s416 = scalar_lea.vmem [#allocation5], %s415
          %s417 = smul.u32 16, %s32
          %s419 = ssub.s32 2048, 2048
          %420 = vsyncadd %s413, %s419
          %s421 = smul.addr %s417, 128
          %s422 = scalar_lea.hbm %s1, %s421
          %s423 = sshll.u32 %s416, 4
          %s424 = int_to_ptr.vmem [resolvable:$true] %s423
          %429 = dma.hbm_to_vmem [thread:$0]  %s422, 2048, %s424, %s413, 128, 128, 8
        $region56: #{tpu_custom_call.1} parent=47 // pred_fallthru
          _
      $region48: #{tpu_custom_call.1} parent=5 // pred_fallthru
        _
      %p430 = scmp.le.s32.totalorder 1, %s32
      %p431 = scmp.lt.s32.totalorder %s32, 3
      %p432 = pnand %p430, %p431
      %p433 = pneg %p432
      // Predicated region
      $region57: #{tpu_custom_call.1} parent=5 // pred_check
        _
      $region58: #{tpu_custom_call.1} parent=5 // pred_check_branch
        %435 = sbr.rel (%p432) target = $region60
      $region59: #{tpu_custom_call.1} parent=5 // pred_region
        %s436 = ssub.s32 %s32, 1
        %s437 = sand.u32 %s45, 1
        %s438 = scalar_lea.sflag [#allocation3], %s437
        %s439 = sand.u32 %s45, 1
        %s440 = smul.addr %s439, 256
        %s441 = scalar_lea.vmem [#allocation2], %s440
        // Predicated region
        $region61: #{tpu_custom_call.1} parent=59 // pred_check
          %p442 = pneg %p58
        $region62: #{tpu_custom_call.1} parent=59 // pred_check_branch
          %444 = sbr.rel (%p442) target = $region64
        $region63: #{tpu_custom_call.1} parent=59 // pred_region
          %445 = dma.done %s438, 4096
        $region64: #{tpu_custom_call.1} parent=59 // pred_fallthru
          _
        %s446 = sand.u32 %s37, 1
        %s447 = scalar_lea.sflag [#allocation6], %s446
        %s448 = sand.u32 %s71, 1
        %s449 = smul.addr %s448, 128
        %s450 = scalar_lea.vmem [#allocation5], %s449
        // Predicated region
        $region65: #{tpu_custom_call.1} parent=59 // pred_check
          %p451 = pneg %p84
        $region66: #{tpu_custom_call.1} parent=59 // pred_check_branch
          %453 = sbr.rel (%p451) target = $region68
        $region67: #{tpu_custom_call.1} parent=59 // pred_region
          %454 = dma.done %s447, 2048
        $region68: #{tpu_custom_call.1} parent=59 // pred_fallthru
          _
        // Predicated region
        $region69: #{tpu_custom_call.1} parent=59 // pred_check
          %p455 = pneg %p105
        $region70: #{tpu_custom_call.1} parent=59 // pred_check_branch
          %457 = sbr.rel (%p455) target = $region72
        $region71: #{tpu_custom_call.1} parent=59 // pred_region
          %458 = dma.done [#allocation6], 4096
        $region72: #{tpu_custom_call.1} parent=59 // pred_fallthru
          _
        // Predicated region
        $region73: #{tpu_custom_call.1} parent=59 // pred_check
          %p459 = pneg %p147
        $region74: #{tpu_custom_call.1} parent=59 // pred_check_branch
          %461 = sbr.rel (%p459) target = $region76
        $region75: #{tpu_custom_call.1} parent=59 // pred_region
          %462 = dma.done [#allocation9], 4096
        $region76: #{tpu_custom_call.1} parent=59 // pred_fallthru
          _
        // Predicated region
        $region77: #{tpu_custom_call.1} parent=59 // pred_check
          %p463 = pneg %p189
        $region78: #{tpu_custom_call.1} parent=59 // pred_check_branch
          %465 = sbr.rel (%p463) target = $region80
        $region79: #{tpu_custom_call.1} parent=59 // pred_region
          %466 = dma.done [#allocation9], 2048
        $region80: #{tpu_custom_call.1} parent=59 // pred_fallthru
          _
        // Predicated region
        $region81: #{tpu_custom_call.1} parent=59 // pred_check
          %p467 = pneg %p231
        $region82: #{tpu_custom_call.1} parent=59 // pred_check_branch
          %469 = sbr.rel (%p467) target = $region84
        $region83: #{tpu_custom_call.1} parent=59 // pred_region
          %470 = dma.done [#allocation12], 4096
        $region84: #{tpu_custom_call.1} parent=59 // pred_fallthru
          _
        %s471 = sand.u32 %s45, 1
        %s472 = scalar_lea.sflag [#allocation3], %s471
        %s473 = sand.u32 %s45, 1
        %s474 = smul.addr %s473, 256
        %s475 = scalar_lea.vmem [#allocation2], %s474
        %p476 = pneg %p58
        %p477 = pneg %p55
        %s478 = sand.u32 %s37, 1
        %s479 = scalar_lea.sflag [#allocation6], %s478
        %s480 = sand.u32 %s71, 1
        %s481 = smul.addr %s480, 128
        %s482 = scalar_lea.vmem [#allocation5], %s481
        %p483 = pneg %p84
        %p484 = pneg %p81
        %p485 = pneg %p105
        %p486 = pneg %p102
        %p487 = pneg %p126
        %p488 = pneg %p123
        %p489 = pneg %p147
        %p490 = pneg %p144
        %p491 = pneg %p168
        %p492 = pneg %p165
        %p493 = pneg %p189
        %p494 = pneg %p186
        %p495 = pneg %p210
        %p496 = pneg %p207
        %p497 = pneg %p231
        %p498 = pneg %p228
        %p499 = pneg %p252
        %p500 = pneg %p249
        %p501 = pneg %p278
        %p502 = pneg %p275
        %s503 = sand.u32 %s265, 1
        %s504 = scalar_lea.sflag [#allocation4], %s503
        %s505 = sand.u32 %s265, 1
        %s506 = smul.addr %s505, 256
        %s507 = scalar_lea.vmem [#allocation13], %s506
        %p508 = pneg %p304
        %p509 = pneg %p301
        %s510 = sand.u32 %s291, 1
        %s511 = scalar_lea.sflag [#allocation15], %s510
        %s512 = sand.u32 %s291, 1
        %s513 = smul.addr %s512, 256
        %s514 = scalar_lea.vmem [#allocation14], %s513
        %s515 = smul.u32 16, %s37
        %s516 = smul.u32 16, %s37
        %s517 = smul.u32 16, %s37
        %s518 = smul.u32 16, %s37
        %v520 = vld [vmem:[%s441] sm:$0xff]
        %v521 = vld [vmem:[%s441 + $0x8] sm:$0xff]
        %v522 = vld [vmem:[%s441 + $0x10] sm:$0xff]
        %v523 = vld [vmem:[%s441 + $0x18] sm:$0xff]
        %v524 = vld [vmem:[%s441 + $0x20] sm:$0xff]
        %v525 = vld [vmem:[%s441 + $0x28] sm:$0xff]
        %v526 = vld [vmem:[%s441 + $0x30] sm:$0xff]
        %v527 = vld [vmem:[%s441 + $0x38] sm:$0xff]
        %v528 = vld [vmem:[%s441 + $0x40] sm:$0xff]
        %v529 = vld [vmem:[%s441 + $0x48] sm:$0xff]
        %v530 = vld [vmem:[%s441 + $0x50] sm:$0xff]
        %v531 = vld [vmem:[%s441 + $0x58] sm:$0xff]
        %v532 = vld [vmem:[%s441 + $0x60] sm:$0xff]
        %v533 = vld [vmem:[%s441 + $0x68] sm:$0xff]
        %v534 = vld [vmem:[%s441 + $0x70] sm:$0xff]
        %v535 = vld [vmem:[%s441 + $0x78] sm:$0xff]
        %v536 = vld [vmem:[%s441 + $0x80] sm:$0xff]
        %v537 = vld [vmem:[%s441 + $0x88] sm:$0xff]
        %v538 = vld [vmem:[%s441 + $0x90] sm:$0xff]
        %v539 = vld [vmem:[%s441 + $0x98] sm:$0xff]
        %v540 = vld [vmem:[%s441 + $0xa0] sm:$0xff]
        %v541 = vld [vmem:[%s441 + $0xa8] sm:$0xff]
        %v542 = vld [vmem:[%s441 + $0xb0] sm:$0xff]
        %v543 = vld [vmem:[%s441 + $0xb8] sm:$0xff]
        %v544 = vld [vmem:[%s441 + $0xc0] sm:$0xff]
        %v545 = vld [vmem:[%s441 + $0xc8] sm:$0xff]
        %v546 = vld [vmem:[%s441 + $0xd0] sm:$0xff]
        %v547 = vld [vmem:[%s441 + $0xd8] sm:$0xff]
        %v548 = vld [vmem:[%s441 + $0xe0] sm:$0xff]
        %v549 = vld [vmem:[%s441 + $0xe8] sm:$0xff]
        %v550 = vld [vmem:[%s441 + $0xf0] sm:$0xff]
        %v551 = vld [vmem:[%s441 + $0xf8] sm:$0xff]
        %v552 = vpack.c.bf16 %v522, %v520
        %v553 = vpack.c.bf16 %v523, %v521
        %v554 = vpack.c.bf16 %v526, %v524
        %v555 = vpack.c.bf16 %v527, %v525
        %v556 = vpack.c.bf16 %v530, %v528
        %v557 = vpack.c.bf16 %v531, %v529
        %v558 = vpack.c.bf16 %v534, %v532
        %v559 = vpack.c.bf16 %v535, %v533
        %v560 = vpack.c.bf16 %v538, %v536
        %v561 = vpack.c.bf16 %v539, %v537
        %v562 = vpack.c.bf16 %v542, %v540
        %v563 = vpack.c.bf16 %v543, %v541
        %v564 = vpack.c.bf16 %v546, %v544
        %v565 = vpack.c.bf16 %v547, %v545
        %v566 = vpack.c.bf16 %v550, %v548
        %v567 = vpack.c.bf16 %v551, %v549
        %v568 = vld [vmem:[#allocation7] sm:$0xff]
        %v569 = vld [vmem:[#allocation7 + $0x8] sm:$0xff]
        %v570 = vld [vmem:[#allocation7 + $0x10] sm:$0xff]
        %v571 = vld [vmem:[#allocation7 + $0x18] sm:$0xff]
        %v572 = vld [vmem:[#allocation7 + $0x20] sm:$0xff]
        %v573 = vld [vmem:[#allocation7 + $0x28] sm:$0xff]
        %v574 = vld [vmem:[#allocation7 + $0x30] sm:$0xff]
        %v575 = vld [vmem:[#allocation7 + $0x38] sm:$0xff]
        %v576 = vld [vmem:[#allocation7 + $0x40] sm:$0xff]
        %v577 = vld [vmem:[#allocation7 + $0x48] sm:$0xff]
        %v578 = vld [vmem:[#allocation7 + $0x50] sm:$0xff]
        %v579 = vld [vmem:[#allocation7 + $0x58] sm:$0xff]
        %v580 = vld [vmem:[#allocation7 + $0x60] sm:$0xff]
        %v581 = vld [vmem:[#allocation7 + $0x68] sm:$0xff]
        %v582 = vld [vmem:[#allocation7 + $0x70] sm:$0xff]
        %v583 = vld [vmem:[#allocation7 + $0x78] sm:$0xff]
        %v584 = vld [vmem:[#allocation7 + $0x80] sm:$0xff]
        %v585 = vld [vmem:[#allocation7 + $0x88] sm:$0xff]
        %v586 = vld [vmem:[#allocation7 + $0x90] sm:$0xff]
        %v587 = vld [vmem:[#allocation7 + $0x98] sm:$0xff]
        %v588 = vld [vmem:[#allocation7 + $0xa0] sm:$0xff]
        %v589 = vld [vmem:[#allocation7 + $0xa8] sm:$0xff]
        %v590 = vld [vmem:[#allocation7 + $0xb0] sm:$0xff]
        %v591 = vld [vmem:[#allocation7 + $0xb8] sm:$0xff]
        %v592 = vld [vmem:[#allocation7 + $0xc0] sm:$0xff]
        %v593 = vld [vmem:[#allocation7 + $0xc8] sm:$0xff]
        %v594 = vld [vmem:[#allocation7 + $0xd0] sm:$0xff]
        %v595 = vld [vmem:[#allocation7 + $0xd8] sm:$0xff]
        %v596 = vld [vmem:[#allocation7 + $0xe0] sm:$0xff]
        %v597 = vld [vmem:[#allocation7 + $0xe8] sm:$0xff]
        %v598 = vld [vmem:[#allocation7 + $0xf0] sm:$0xff]
        %v599 = vld [vmem:[#allocation7 + $0xf8] sm:$0xff]
        %v600 = vld [vmem:[%s3] sm:$0x3]
        %v602 = vlaneseq
        %v603 = vshrl.u32 %v602, 7
        %v604 = vsub.s32 0, %v603
        %v605 = vrot.slane %v600, %v604
        %v606 = vlaneseq
        %v607 = vshrl.u32 %v606, 7
        %v608 = vsub.s32 1, %v607
        %v609 = vrot.slane %v600, %v608
        %v644 = vunpack.c.l.b16 %v568
        %v645 = vunpack.c.h.b16 %v568
        %v646 = vunpack.c.l.b16 %v569
        %v647 = vunpack.c.h.b16 %v569
        %v648 = vunpack.c.l.b16 %v570
        %v649 = vunpack.c.h.b16 %v570
        %v650 = vunpack.c.l.b16 %v571
        %v651 = vunpack.c.h.b16 %v571
        %v652 = vunpack.c.l.b16 %v572
        %v653 = vunpack.c.h.b16 %v572
        %v654 = vunpack.c.l.b16 %v573
        %v655 = vunpack.c.h.b16 %v573
        %v656 = vunpack.c.l.b16 %v574
        %v657 = vunpack.c.h.b16 %v574
        %v658 = vunpack.c.l.b16 %v575
        %v659 = vunpack.c.h.b16 %v575
        %v660 = vunpack.c.l.b16 %v576
        %v661 = vunpack.c.h.b16 %v576
        %v662 = vunpack.c.l.b16 %v577
        %v663 = vunpack.c.h.b16 %v577
        %v664 = vunpack.c.l.b16 %v578
        %v665 = vunpack.c.h.b16 %v578
        %v666 = vunpack.c.l.b16 %v579
        %v667 = vunpack.c.h.b16 %v579
        %v668 = vunpack.c.l.b16 %v580
        %v669 = vunpack.c.h.b16 %v580
        %v670 = vunpack.c.l.b16 %v581
        %v671 = vunpack.c.h.b16 %v581
        %v672 = vunpack.c.l.b16 %v582
        %v673 = vunpack.c.h.b16 %v582
        %v674 = vunpack.c.l.b16 %v583
        %v675 = vunpack.c.h.b16 %v583
        %v676 = vunpack.c.l.b16 %v584
        %v677 = vunpack.c.h.b16 %v584
        %v678 = vunpack.c.l.b16 %v585
        %v679 = vunpack.c.h.b16 %v585
        %v680 = vunpack.c.l.b16 %v586
        %v681 = vunpack.c.h.b16 %v586
        %v682 = vunpack.c.l.b16 %v587
        %v683 = vunpack.c.h.b16 %v587
        %v684 = vunpack.c.l.b16 %v588
        %v685 = vunpack.c.h.b16 %v588
        %v686 = vunpack.c.l.b16 %v589
        %v687 = vunpack.c.h.b16 %v589
        %v688 = vunpack.c.l.b16 %v590
        %v689 = vunpack.c.h.b16 %v590
        %v690 = vunpack.c.l.b16 %v591
        %v691 = vunpack.c.h.b16 %v591
        %v692 = vunpack.c.l.b16 %v592
        %v693 = vunpack.c.h.b16 %v592
        %v694 = vunpack.c.l.b16 %v593
        %v695 = vunpack.c.h.b16 %v593
        %v696 = vunpack.c.l.b16 %v594
        %v697 = vunpack.c.h.b16 %v594
        %v698 = vunpack.c.l.b16 %v595
        %v699 = vunpack.c.h.b16 %v595
        %v700 = vunpack.c.l.b16 %v596
        %v701 = vunpack.c.h.b16 %v596
        %v702 = vunpack.c.l.b16 %v597
        %v703 = vunpack.c.h.b16 %v597
        %v704 = vunpack.c.l.b16 %v598
        %v705 = vunpack.c.h.b16 %v598
        %v706 = vunpack.c.l.b16 %v599
        %v707 = vunpack.c.h.b16 %v599
        %v708 = vpack.c.b16 %v646, %v644
        %v709 = vpack.c.b16 %v647, %v645
        %v710 = vpack.c.b16 %v650, %v648
        %v711 = vpack.c.b16 %v651, %v649
        %v712 = vpack.c.b16 %v654, %v652
        %v713 = vpack.c.b16 %v655, %v653
        %v714 = vpack.c.b16 %v658, %v656
        %v715 = vpack.c.b16 %v659, %v657
        %v716 = vpack.c.b16 %v662, %v660
        %v717 = vpack.c.b16 %v663, %v661
        %v718 = vpack.c.b16 %v666, %v664
        %v719 = vpack.c.b16 %v667, %v665
        %v720 = vpack.c.b16 %v670, %v668
        %v721 = vpack.c.b16 %v671, %v669
        %v722 = vpack.c.b16 %v674, %v672
        %v723 = vpack.c.b16 %v675, %v673
        %v724 = vpack.c.b16 %v678, %v676
        %v725 = vpack.c.b16 %v679, %v677
        %v726 = vpack.c.b16 %v682, %v680
        %v727 = vpack.c.b16 %v683, %v681
        %v728 = vpack.c.b16 %v686, %v684
        %v729 = vpack.c.b16 %v687, %v685
        %v730 = vpack.c.b16 %v690, %v688
        %v731 = vpack.c.b16 %v691, %v689
        %v732 = vpack.c.b16 %v694, %v692
        %v733 = vpack.c.b16 %v695, %v693
        %v734 = vpack.c.b16 %v698, %v696
        %v735 = vpack.c.b16 %v699, %v697
        %v736 = vpack.c.b16 %v702, %v700
        %v737 = vpack.c.b16 %v703, %v701
        %v738 = vpack.c.b16 %v706, %v704
        %v739 = vpack.c.b16 %v707, %v705
        %772 = vmatprep.subr.bf16.mxu0 %v723
        %773 = vmatpush1.bf16.msra.mxu0 %v722
        %774 = vmatprep.subr.bf16.mxu0 %v721
        %775 = vmatpush1.bf16.msra.mxu0 %v720
        %776 = vmatprep.subr.bf16.mxu0 %v719
        %777 = vmatpush1.bf16.msra.mxu0 %v718
        %778 = vmatprep.subr.bf16.mxu0 %v717
        %779 = vmatpush1.bf16.msra.mxu0 %v716
        %780 = vmatprep.subr.bf16.mxu0 %v715
        %781 = vmatpush1.bf16.msra.mxu0 %v714
        %782 = vmatprep.subr.bf16.mxu0 %v713
        %783 = vmatpush1.bf16.msra.mxu0 %v712
        %784 = vmatprep.subr.bf16.mxu0 %v711
        %785 = vmatpush1.bf16.msra.mxu0 %v710
        %786 = vmatprep.subr.bf16.mxu0 %v709
        %787 = vmatpush1.bf16.msra.mxu0 %v708
        %788 = vmatprep.subr.bf16.mxu0 %v739
        %789 = vmatpush2.bf16.msra.mxu0 %v738
        %790 = vmatprep.subr.bf16.mxu0 %v737
        %791 = vmatpush2.bf16.msra.mxu0 %v736
        %792 = vmatprep.subr.bf16.mxu0 %v735
        %793 = vmatpush2.bf16.msra.mxu0 %v734
        %794 = vmatprep.subr.bf16.mxu0 %v733
        %795 = vmatpush2.bf16.msra.mxu0 %v732
        %796 = vmatprep.subr.bf16.mxu0 %v731
        %797 = vmatpush2.bf16.msra.mxu0 %v730
        %798 = vmatprep.subr.bf16.mxu0 %v729
        %799 = vmatpush2.bf16.msra.mxu0 %v728
        %800 = vmatprep.subr.bf16.mxu0 %v727
        %801 = vmatpush2.bf16.msra.mxu0 %v726
        %802 = vmatprep.subr.bf16.mxu0 %v725
        %803 = vmatpush2.bf16.msra.mxu0 %v724
        %804 = vmatprep.mubr.bf16.mxu0 %v553
        %805 = vmatmul.mubr.bf16.gmra.mxu0 %v552
        %v806 = vpop.f32.mrf.mxu0
        %v807 = vadd.f32 %v605, %v806
        %v808 = vpop.f32.mrf.mxu0
        %v809 = vadd.f32 %v609, %v808
        %v810 = vpop.f32.mrf.mxu0
        %v811 = vadd.f32 %v605, %v810
        %v812 = vpop.f32.mrf.mxu0
        %v813 = vadd.f32 %v609, %v812
        %814 = vmatprep.mubr.bf16.mxu0 %v555
        %815 = vmatmul.mubr.bf16.gmra.mxu0 %v554
        %v816 = vpop.f32.mrf.mxu0
        %v817 = vadd.f32 %v605, %v816
        %v818 = vpop.f32.mrf.mxu0
        %v819 = vadd.f32 %v609, %v818
        %v820 = vpop.f32.mrf.mxu0
        %v821 = vadd.f32 %v605, %v820
        %v822 = vpop.f32.mrf.mxu0
        %v823 = vadd.f32 %v609, %v822
        %824 = vmatprep.mubr.bf16.mxu0 %v557
        %825 = vmatmul.mubr.bf16.gmra.mxu0 %v556
        %v826 = vpop.f32.mrf.mxu0
        %v827 = vadd.f32 %v605, %v826
        %v828 = vpop.f32.mrf.mxu0
        %v829 = vadd.f32 %v609, %v828
        %v830 = vpop.f32.mrf.mxu0
        %v831 = vadd.f32 %v605, %v830
        %v832 = vpop.f32.mrf.mxu0
        %v833 = vadd.f32 %v609, %v832
        %834 = vmatprep.mubr.bf16.mxu0 %v559
        %835 = vmatmul.mubr.bf16.gmra.mxu0 %v558
        %v836 = vpop.f32.mrf.mxu0
        %v837 = vadd.f32 %v605, %v836
        %v838 = vpop.f32.mrf.mxu0
        %v839 = vadd.f32 %v609, %v838
        %v840 = vpop.f32.mrf.mxu0
        %v841 = vadd.f32 %v605, %v840
        %v842 = vpop.f32.mrf.mxu0
        %v843 = vadd.f32 %v609, %v842
        %844 = vmatprep.mubr.bf16.mxu0 %v561
        %845 = vmatmul.mubr.bf16.gmra.mxu0 %v560
        %v846 = vpop.f32.mrf.mxu0
        %v847 = vadd.f32 %v605, %v846
        %v848 = vpop.f32.mrf.mxu0
        %v849 = vadd.f32 %v609, %v848
        %v850 = vpop.f32.mrf.mxu0
        %v851 = vadd.f32 %v605, %v850
        %v852 = vpop.f32.mrf.mxu0
        %v853 = vadd.f32 %v609, %v852
        %854 = vmatprep.mubr.bf16.mxu0 %v563
        %855 = vmatmul.mubr.bf16.gmra.mxu0 %v562
        %v856 = vpop.f32.mrf.mxu0
        %v857 = vadd.f32 %v605, %v856
        %v858 = vpop.f32.mrf.mxu0
        %v859 = vadd.f32 %v609, %v858
        %v860 = vpop.f32.mrf.mxu0
        %v861 = vadd.f32 %v605, %v860
        %v862 = vpop.f32.mrf.mxu0
        %v863 = vadd.f32 %v609, %v862
        %864 = vmatprep.mubr.bf16.mxu0 %v565
        %865 = vmatmul.mubr.bf16.gmra.mxu0 %v564
        %v866 = vpop.f32.mrf.mxu0
        %v867 = vadd.f32 %v605, %v866
        %v868 = vpop.f32.mrf.mxu0
        %v869 = vadd.f32 %v609, %v868
        %v870 = vpop.f32.mrf.mxu0
        %v871 = vadd.f32 %v605, %v870
        %v872 = vpop.f32.mrf.mxu0
        %v873 = vadd.f32 %v609, %v872
        %874 = vmatprep.mubr.bf16.mxu0 %v567
        %875 = vmatmul.mubr.bf16.gmra.mxu0 %v566
        %v876 = vpop.f32.mrf.mxu0
        %v877 = vadd.f32 %v605, %v876
        %v878 = vpop.f32.mrf.mxu0
        %v879 = vadd.f32 %v609, %v878
        %v880 = vpop.f32.mrf.mxu0
        %v881 = vadd.f32 %v605, %v880
        %v882 = vpop.f32.mrf.mxu0
        %v883 = vadd.f32 %v609, %v882
        %884 = vdwg.mxu0
        %v885 = vmax.f32 %v807, 0.0
        %v886 = vmax.f32 %v809, 0.0
        %v887 = vmax.f32 %v811, 0.0
        %v888 = vmax.f32 %v813, 0.0
        %v889 = vmax.f32 %v817, 0.0
        %v890 = vmax.f32 %v819, 0.0
        %v891 = vmax.f32 %v821, 0.0
        %v892 = vmax.f32 %v823, 0.0
        %v893 = vmax.f32 %v827, 0.0
        %v894 = vmax.f32 %v829, 0.0
        %v895 = vmax.f32 %v831, 0.0
        %v896 = vmax.f32 %v833, 0.0
        %v897 = vmax.f32 %v837, 0.0
        %v898 = vmax.f32 %v839, 0.0
        %v899 = vmax.f32 %v841, 0.0
        %v900 = vmax.f32 %v843, 0.0
        %v901 = vmax.f32 %v847, 0.0
        %v902 = vmax.f32 %v849, 0.0
        %v903 = vmax.f32 %v851, 0.0
        %v904 = vmax.f32 %v853, 0.0
        %v905 = vmax.f32 %v857, 0.0
        %v906 = vmax.f32 %v859, 0.0
        %v907 = vmax.f32 %v861, 0.0
        %v908 = vmax.f32 %v863, 0.0
        %v909 = vmax.f32 %v867, 0.0
        %v910 = vmax.f32 %v869, 0.0
        %v911 = vmax.f32 %v871, 0.0
        %v912 = vmax.f32 %v873, 0.0
        %v913 = vmax.f32 %v877, 0.0
        %v914 = vmax.f32 %v879, 0.0
        %v915 = vmax.f32 %v881, 0.0
        %v916 = vmax.f32 %v883, 0.0
        %v917 = vpack.c.bf16 %v887, %v885
        %v918 = vpack.c.bf16 %v888, %v886
        %v919 = vpack.c.bf16 %v891, %v889
        %v920 = vpack.c.bf16 %v892, %v890
        %v921 = vpack.c.bf16 %v895, %v893
        %v922 = vpack.c.bf16 %v896, %v894
        %v923 = vpack.c.bf16 %v899, %v897
        %v924 = vpack.c.bf16 %v900, %v898
        %v925 = vpack.c.bf16 %v903, %v901
        %v926 = vpack.c.bf16 %v904, %v902
        %v927 = vpack.c.bf16 %v907, %v905
        %v928 = vpack.c.bf16 %v908, %v906
        %v929 = vpack.c.bf16 %v911, %v909
        %v930 = vpack.c.bf16 %v912, %v910
        %v931 = vpack.c.bf16 %v915, %v913
        %v932 = vpack.c.bf16 %v916, %v914
        %v933 = vld [vmem:[#allocation8] sm:$0xff]
        %v934 = vld [vmem:[#allocation8 + $0x8] sm:$0xff]
        %v935 = vld [vmem:[#allocation8 + $0x10] sm:$0xff]
        %v936 = vld [vmem:[#allocation8 + $0x18] sm:$0xff]
        %v937 = vld [vmem:[#allocation8 + $0x20] sm:$0xff]
        %v938 = vld [vmem:[#allocation8 + $0x28] sm:$0xff]
        %v939 = vld [vmem:[#allocation8 + $0x30] sm:$0xff]
        %v940 = vld [vmem:[#allocation8 + $0x38] sm:$0xff]
        %v941 = vld [vmem:[#allocation8 + $0x40] sm:$0xff]
        %v942 = vld [vmem:[#allocation8 + $0x48] sm:$0xff]
        %v943 = vld [vmem:[#allocation8 + $0x50] sm:$0xff]
        %v944 = vld [vmem:[#allocation8 + $0x58] sm:$0xff]
        %v945 = vld [vmem:[#allocation8 + $0x60] sm:$0xff]
        %v946 = vld [vmem:[#allocation8 + $0x68] sm:$0xff]
        %v947 = vld [vmem:[#allocation8 + $0x70] sm:$0xff]
        %v948 = vld [vmem:[#allocation8 + $0x78] sm:$0xff]
        %v949 = vld [vmem:[#allocation8 + $0x80] sm:$0xff]
        %v950 = vld [vmem:[#allocation8 + $0x88] sm:$0xff]
        %v951 = vld [vmem:[#allocation8 + $0x90] sm:$0xff]
        %v952 = vld [vmem:[#allocation8 + $0x98] sm:$0xff]
        %v953 = vld [vmem:[#allocation8 + $0xa0] sm:$0xff]
        %v954 = vld [vmem:[#allocation8 + $0xa8] sm:$0xff]
        %v955 = vld [vmem:[#allocation8 + $0xb0] sm:$0xff]
        %v956 = vld [vmem:[#allocation8 + $0xb8] sm:$0xff]
        %v957 = vld [vmem:[#allocation8 + $0xc0] sm:$0xff]
        %v958 = vld [vmem:[#allocation8 + $0xc8] sm:$0xff]
        %v959 = vld [vmem:[#allocation8 + $0xd0] sm:$0xff]
        %v960 = vld [vmem:[#allocation8 + $0xd8] sm:$0xff]
        %v961 = vld [vmem:[#allocation8 + $0xe0] sm:$0xff]
        %v962 = vld [vmem:[#allocation8 + $0xe8] sm:$0xff]
        %v963 = vld [vmem:[#allocation8 + $0xf0] sm:$0xff]
        %v964 = vld [vmem:[#allocation8 + $0xf8] sm:$0xff]
        %v965 = vld [vmem:[%s5] sm:$0x3]
        %v967 = vlaneseq
        %v968 = vshrl.u32 %v967, 7
        %v969 = vsub.s32 0, %v968
        %v970 = vrot.slane %v965, %v969
        %v971 = vlaneseq
        %v972 = vshrl.u32 %v971, 7
        %v973 = vsub.s32 1, %v972
        %v974 = vrot.slane %v965, %v973
        %v1009 = vunpack.c.l.b16 %v933
        %v1010 = vunpack.c.h.b16 %v933
        %v1011 = vunpack.c.l.b16 %v934
        %v1012 = vunpack.c.h.b16 %v934
        %v1013 = vunpack.c.l.b16 %v935
        %v1014 = vunpack.c.h.b16 %v935
        %v1015 = vunpack.c.l.b16 %v936
        %v1016 = vunpack.c.h.b16 %v936
        %v1017 = vunpack.c.l.b16 %v937
        %v1018 = vunpack.c.h.b16 %v937
        %v1019 = vunpack.c.l.b16 %v938
        %v1020 = vunpack.c.h.b16 %v938
        %v1021 = vunpack.c.l.b16 %v939
        %v1022 = vunpack.c.h.b16 %v939
        %v1023 = vunpack.c.l.b16 %v940
        %v1024 = vunpack.c.h.b16 %v940
        %v1025 = vunpack.c.l.b16 %v941
        %v1026 = vunpack.c.h.b16 %v941
        %v1027 = vunpack.c.l.b16 %v942
        %v1028 = vunpack.c.h.b16 %v942
        %v1029 = vunpack.c.l.b16 %v943
        %v1030 = vunpack.c.h.b16 %v943
        %v1031 = vunpack.c.l.b16 %v944
        %v1032 = vunpack.c.h.b16 %v944
        %v1033 = vunpack.c.l.b16 %v945
        %v1034 = vunpack.c.h.b16 %v945
        %v1035 = vunpack.c.l.b16 %v946
        %v1036 = vunpack.c.h.b16 %v946
        %v1037 = vunpack.c.l.b16 %v947
        %v1038 = vunpack.c.h.b16 %v947
        %v1039 = vunpack.c.l.b16 %v948
        %v1040 = vunpack.c.h.b16 %v948
        %v1041 = vunpack.c.l.b16 %v949
        %v1042 = vunpack.c.h.b16 %v949
        %v1043 = vunpack.c.l.b16 %v950
        %v1044 = vunpack.c.h.b16 %v950
        %v1045 = vunpack.c.l.b16 %v951
        %v1046 = vunpack.c.h.b16 %v951
        %v1047 = vunpack.c.l.b16 %v952
        %v1048 = vunpack.c.h.b16 %v952
        %v1049 = vunpack.c.l.b16 %v953
        %v1050 = vunpack.c.h.b16 %v953
        %v1051 = vunpack.c.l.b16 %v954
        %v1052 = vunpack.c.h.b16 %v954
        %v1053 = vunpack.c.l.b16 %v955
        %v1054 = vunpack.c.h.b16 %v955
        %v1055 = vunpack.c.l.b16 %v956
        %v1056 = vunpack.c.h.b16 %v956
        %v1057 = vunpack.c.l.b16 %v957
        %v1058 = vunpack.c.h.b16 %v957
        %v1059 = vunpack.c.l.b16 %v958
        %v1060 = vunpack.c.h.b16 %v958
        %v1061 = vunpack.c.l.b16 %v959
        %v1062 = vunpack.c.h.b16 %v959
        %v1063 = vunpack.c.l.b16 %v960
        %v1064 = vunpack.c.h.b16 %v960
        %v1065 = vunpack.c.l.b16 %v961
        %v1066 = vunpack.c.h.b16 %v961
        %v1067 = vunpack.c.l.b16 %v962
        %v1068 = vunpack.c.h.b16 %v962
        %v1069 = vunpack.c.l.b16 %v963
        %v1070 = vunpack.c.h.b16 %v963
        %v1071 = vunpack.c.l.b16 %v964
        %v1072 = vunpack.c.h.b16 %v964
        %v1073 = vpack.c.b16 %v1011, %v1009
        %v1074 = vpack.c.b16 %v1012, %v1010
        %v1075 = vpack.c.b16 %v1015, %v1013
        %v1076 = vpack.c.b16 %v1016, %v1014
        %v1077 = vpack.c.b16 %v1019, %v1017
        %v1078 = vpack.c.b16 %v1020, %v1018
        %v1079 = vpack.c.b16 %v1023, %v1021
        %v1080 = vpack.c.b16 %v1024, %v1022
        %v1081 = vpack.c.b16 %v1027, %v1025
        %v1082 = vpack.c.b16 %v1028, %v1026
        %v1083 = vpack.c.b16 %v1031, %v1029
        %v1084 = vpack.c.b16 %v1032, %v1030
        %v1085 = vpack.c.b16 %v1035, %v1033
        %v1086 = vpack.c.b16 %v1036, %v1034
        %v1087 = vpack.c.b16 %v1039, %v1037
        %v1088 = vpack.c.b16 %v1040, %v1038
        %v1089 = vpack.c.b16 %v1043, %v1041
        %v1090 = vpack.c.b16 %v1044, %v1042
        %v1091 = vpack.c.b16 %v1047, %v1045
        %v1092 = vpack.c.b16 %v1048, %v1046
        %v1093 = vpack.c.b16 %v1051, %v1049
        %v1094 = vpack.c.b16 %v1052, %v1050
        %v1095 = vpack.c.b16 %v1055, %v1053
        %v1096 = vpack.c.b16 %v1056, %v1054
        %v1097 = vpack.c.b16 %v1059, %v1057
        %v1098 = vpack.c.b16 %v1060, %v1058
        %v1099 = vpack.c.b16 %v1063, %v1061
        %v1100 = vpack.c.b16 %v1064, %v1062
        %v1101 = vpack.c.b16 %v1067, %v1065
        %v1102 = vpack.c.b16 %v1068, %v1066
        %v1103 = vpack.c.b16 %v1071, %v1069
        %v1104 = vpack.c.b16 %v1072, %v1070
        %1137 = vmatprep.subr.bf16.mxu0 %v1088
        %1138 = vmatpush1.bf16.msra.mxu0 %v1087
        %1139 = vmatprep.subr.bf16.mxu0 %v1086
        %1140 = vmatpush1.bf16.msra.mxu0 %v1085
        %1141 = vmatprep.subr.bf16.mxu0 %v1084
        %1142 = vmatpush1.bf16.msra.mxu0 %v1083
        %1143 = vmatprep.subr.bf16.mxu0 %v1082
        %1144 = vmatpush1.bf16.msra.mxu0 %v1081
        %1145 = vmatprep.subr.bf16.mxu0 %v1080
        %1146 = vmatpush1.bf16.msra.mxu0 %v1079
        %1147 = vmatprep.subr.bf16.mxu0 %v1078
        %1148 = vmatpush1.bf16.msra.mxu0 %v1077
        %1149 = vmatprep.subr.bf16.mxu0 %v1076
        %1150 = vmatpush1.bf16.msra.mxu0 %v1075
        %1151 = vmatprep.subr.bf16.mxu0 %v1074
        %1152 = vmatpush1.bf16.msra.mxu0 %v1073
        %1153 = vmatprep.subr.bf16.mxu0 %v1104
        %1154 = vmatpush2.bf16.msra.mxu0 %v1103
        %1155 = vmatprep.subr.bf16.mxu0 %v1102
        %1156 = vmatpush2.bf16.msra.mxu0 %v1101
        %1157 = vmatprep.subr.bf16.mxu0 %v1100
        %1158 = vmatpush2.bf16.msra.mxu0 %v1099
        %1159 = vmatprep.subr.bf16.mxu0 %v1098
        %1160 = vmatpush2.bf16.msra.mxu0 %v1097
        %1161 = vmatprep.subr.bf16.mxu0 %v1096
        %1162 = vmatpush2.bf16.msra.mxu0 %v1095
        %1163 = vmatprep.subr.bf16.mxu0 %v1094
        %1164 = vmatpush2.bf16.msra.mxu0 %v1093
        %1165 = vmatprep.subr.bf16.mxu0 %v1092
        %1166 = vmatpush2.bf16.msra.mxu0 %v1091
        %1167 = vmatprep.subr.bf16.mxu0 %v1090
        %1168 = vmatpush2.bf16.msra.mxu0 %v1089
        %1169 = vmatprep.mubr.bf16.mxu0 %v918
        %1170 = vmatmul.mubr.bf16.gmra.mxu0 %v917
        %v1171 = vpop.f32.mrf.mxu0
        %v1172 = vadd.f32 %v970, %v1171
        %v1173 = vpop.f32.mrf.mxu0
        %v1174 = vadd.f32 %v974, %v1173
        %v1175 = vpop.f32.mrf.mxu0
        %v1176 = vadd.f32 %v970, %v1175
        %v1177 = vpop.f32.mrf.mxu0
        %v1178 = vadd.f32 %v974, %v1177
        %1179 = vmatprep.mubr.bf16.mxu0 %v920
        %1180 = vmatmul.mubr.bf16.gmra.mxu0 %v919
        %v1181 = vpop.f32.mrf.mxu0
        %v1182 = vadd.f32 %v970, %v1181
        %v1183 = vpop.f32.mrf.mxu0
        %v1184 = vadd.f32 %v974, %v1183
        %v1185 = vpop.f32.mrf.mxu0
        %v1186 = vadd.f32 %v970, %v1185
        %v1187 = vpop.f32.mrf.mxu0
        %v1188 = vadd.f32 %v974, %v1187
        %1189 = vmatprep.mubr.bf16.mxu0 %v922
        %1190 = vmatmul.mubr.bf16.gmra.mxu0 %v921
        %v1191 = vpop.f32.mrf.mxu0
        %v1192 = vadd.f32 %v970, %v1191
        %v1193 = vpop.f32.mrf.mxu0
        %v1194 = vadd.f32 %v974, %v1193
        %v1195 = vpop.f32.mrf.mxu0
        %v1196 = vadd.f32 %v970, %v1195
        %v1197 = vpop.f32.mrf.mxu0
        %v1198 = vadd.f32 %v974, %v1197
        %1199 = vmatprep.mubr.bf16.mxu0 %v924
        %1200 = vmatmul.mubr.bf16.gmra.mxu0 %v923
        %v1201 = vpop.f32.mrf.mxu0
        %v1202 = vadd.f32 %v970, %v1201
        %v1203 = vpop.f32.mrf.mxu0
        %v1204 = vadd.f32 %v974, %v1203
        %v1205 = vpop.f32.mrf.mxu0
        %v1206 = vadd.f32 %v970, %v1205
        %v1207 = vpop.f32.mrf.mxu0
        %v1208 = vadd.f32 %v974, %v1207
        %1209 = vmatprep.mubr.bf16.mxu0 %v926
        %1210 = vmatmul.mubr.bf16.gmra.mxu0 %v925
        %v1211 = vpop.f32.mrf.mxu0
        %v1212 = vadd.f32 %v970, %v1211
        %v1213 = vpop.f32.mrf.mxu0
        %v1214 = vadd.f32 %v974, %v1213
        %v1215 = vpop.f32.mrf.mxu0
        %v1216 = vadd.f32 %v970, %v1215
        %v1217 = vpop.f32.mrf.mxu0
        %v1218 = vadd.f32 %v974, %v1217
        %1219 = vmatprep.mubr.bf16.mxu0 %v928
        %1220 = vmatmul.mubr.bf16.gmra.mxu0 %v927
        %v1221 = vpop.f32.mrf.mxu0
        %v1222 = vadd.f32 %v970, %v1221
        %v1223 = vpop.f32.mrf.mxu0
        %v1224 = vadd.f32 %v974, %v1223
        %v1225 = vpop.f32.mrf.mxu0
        %v1226 = vadd.f32 %v970, %v1225
        %v1227 = vpop.f32.mrf.mxu0
        %v1228 = vadd.f32 %v974, %v1227
        %1229 = vmatprep.mubr.bf16.mxu0 %v930
        %1230 = vmatmul.mubr.bf16.gmra.mxu0 %v929
        %v1231 = vpop.f32.mrf.mxu0
        %v1232 = vadd.f32 %v970, %v1231
        %v1233 = vpop.f32.mrf.mxu0
        %v1234 = vadd.f32 %v974, %v1233
        %v1235 = vpop.f32.mrf.mxu0
        %v1236 = vadd.f32 %v970, %v1235
        %v1237 = vpop.f32.mrf.mxu0
        %v1238 = vadd.f32 %v974, %v1237
        %1239 = vmatprep.mubr.bf16.mxu0 %v932
        %1240 = vmatmul.mubr.bf16.gmra.mxu0 %v931
        %v1241 = vpop.f32.mrf.mxu0
        %v1242 = vadd.f32 %v970, %v1241
        %v1243 = vpop.f32.mrf.mxu0
        %v1244 = vadd.f32 %v974, %v1243
        %v1245 = vpop.f32.mrf.mxu0
        %v1246 = vadd.f32 %v970, %v1245
        %v1247 = vpop.f32.mrf.mxu0
        %v1248 = vadd.f32 %v974, %v1247
        %1249 = vdwg.mxu0
        %1250 = vst [vmem:[%s514] sm:$0xff] %v1172
        %1251 = vst [vmem:[%s514 + $0x8] sm:$0xff] %v1174
        %1252 = vst [vmem:[%s514 + $0x10] sm:$0xff] %v1176
        %1253 = vst [vmem:[%s514 + $0x18] sm:$0xff] %v1178
        %1254 = vst [vmem:[%s514 + $0x20] sm:$0xff] %v1182
        %1255 = vst [vmem:[%s514 + $0x28] sm:$0xff] %v1184
        %1256 = vst [vmem:[%s514 + $0x30] sm:$0xff] %v1186
        %1257 = vst [vmem:[%s514 + $0x38] sm:$0xff] %v1188
        %1258 = vst [vmem:[%s514 + $0x40] sm:$0xff] %v1192
        %1259 = vst [vmem:[%s514 + $0x48] sm:$0xff] %v1194
        %1260 = vst [vmem:[%s514 + $0x50] sm:$0xff] %v1196
        %1261 = vst [vmem:[%s514 + $0x58] sm:$0xff] %v1198
        %1262 = vst [vmem:[%s514 + $0x60] sm:$0xff] %v1202
        %1263 = vst [vmem:[%s514 + $0x68] sm:$0xff] %v1204
        %1264 = vst [vmem:[%s514 + $0x70] sm:$0xff] %v1206
        %1265 = vst [vmem:[%s514 + $0x78] sm:$0xff] %v1208
        %1266 = vst [vmem:[%s514 + $0x80] sm:$0xff] %v1212
        %1267 = vst [vmem:[%s514 + $0x88] sm:$0xff] %v1214
        %1268 = vst [vmem:[%s514 + $0x90] sm:$0xff] %v1216
        %1269 = vst [vmem:[%s514 + $0x98] sm:$0xff] %v1218
        %1270 = vst [vmem:[%s514 + $0xa0] sm:$0xff] %v1222
        %1271 = vst [vmem:[%s514 + $0xa8] sm:$0xff] %v1224
        %1272 = vst [vmem:[%s514 + $0xb0] sm:$0xff] %v1226
        %1273 = vst [vmem:[%s514 + $0xb8] sm:$0xff] %v1228
        %1274 = vst [vmem:[%s514 + $0xc0] sm:$0xff] %v1232
        %1275 = vst [vmem:[%s514 + $0xc8] sm:$0xff] %v1234
        %1276 = vst [vmem:[%s514 + $0xd0] sm:$0xff] %v1236
        %1277 = vst [vmem:[%s514 + $0xd8] sm:$0xff] %v1238
        %1278 = vst [vmem:[%s514 + $0xe0] sm:$0xff] %v1242
        %1279 = vst [vmem:[%s514 + $0xe8] sm:$0xff] %v1244
        %1280 = vst [vmem:[%s514 + $0xf0] sm:$0xff] %v1246
        %1281 = vst [vmem:[%s514 + $0xf8] sm:$0xff] %v1248
        %v1282 = vld [vmem:[%s450] sm:$0xff]
        %v1283 = vld [vmem:[%s450 + $0x8] sm:$0xff]
        %v1284 = vld [vmem:[%s450 + $0x10] sm:$0xff]
        %v1285 = vld [vmem:[%s450 + $0x18] sm:$0xff]
        %v1286 = vld [vmem:[%s450 + $0x20] sm:$0xff]
        %v1287 = vld [vmem:[%s450 + $0x28] sm:$0xff]
        %v1288 = vld [vmem:[%s450 + $0x30] sm:$0xff]
        %v1289 = vld [vmem:[%s450 + $0x38] sm:$0xff]
        %v1290 = vld [vmem:[%s450 + $0x40] sm:$0xff]
        %v1291 = vld [vmem:[%s450 + $0x48] sm:$0xff]
        %v1292 = vld [vmem:[%s450 + $0x50] sm:$0xff]
        %v1293 = vld [vmem:[%s450 + $0x58] sm:$0xff]
        %v1294 = vld [vmem:[%s450 + $0x60] sm:$0xff]
        %v1295 = vld [vmem:[%s450 + $0x68] sm:$0xff]
        %v1296 = vld [vmem:[%s450 + $0x70] sm:$0xff]
        %v1297 = vld [vmem:[%s450 + $0x78] sm:$0xff]
        %v1298 = vmul.f32 %v1174, 0.5
        %v1299 = vmul.f32 %v1178, 0.5
        %v1300 = vmul.f32 %v1184, 0.5
        %v1301 = vmul.f32 %v1188, 0.5
        %v1302 = vmul.f32 %v1194, 0.5
        %v1303 = vmul.f32 %v1198, 0.5
        %v1304 = vmul.f32 %v1204, 0.5
        %v1305 = vmul.f32 %v1208, 0.5
        %v1306 = vmul.f32 %v1214, 0.5
        %v1307 = vmul.f32 %v1218, 0.5
        %v1308 = vmul.f32 %v1224, 0.5
        %v1309 = vmul.f32 %v1228, 0.5
        %v1310 = vmul.f32 %v1234, 0.5
        %v1311 = vmul.f32 %v1238, 0.5
        %v1312 = vmul.f32 %v1244, 0.5
        %v1313 = vmul.f32 %v1248, 0.5
        %v1314 = vmul.f32 %v1298, 1.442695
        %v1315 = vpow.pop %v1314
        %v1316 = vmul.f32 %v1299, 1.442695
        %v1317 = vpow.pop %v1316
        %v1318 = vmul.f32 %v1300, 1.442695
        %v1319 = vpow.pop %v1318
        %v1320 = vmul.f32 %v1301, 1.442695
        %v1321 = vpow.pop %v1320
        %v1322 = vmul.f32 %v1302, 1.442695
        %v1323 = vpow.pop %v1322
        %v1324 = vmul.f32 %v1303, 1.442695
        %v1325 = vpow.pop %v1324
        %v1326 = vmul.f32 %v1304, 1.442695
        %v1327 = vpow.pop %v1326
        %v1328 = vmul.f32 %v1305, 1.442695
        %v1329 = vpow.pop %v1328
        %v1330 = vmul.f32 %v1306, 1.442695
        %v1331 = vpow.pop %v1330
        %v1332 = vmul.f32 %v1307, 1.442695
        %v1333 = vpow.pop %v1332
        %v1334 = vmul.f32 %v1308, 1.442695
        %v1335 = vpow.pop %v1334
        %v1336 = vmul.f32 %v1309, 1.442695
        %v1337 = vpow.pop %v1336
        %v1338 = vmul.f32 %v1310, 1.442695
        %v1339 = vpow.pop %v1338
        %v1340 = vmul.f32 %v1311, 1.442695
        %v1341 = vpow.pop %v1340
        %v1342 = vmul.f32 %v1312, 1.442695
        %v1343 = vpow.pop %v1342
        %v1344 = vmul.f32 %v1313, 1.442695
        %v1345 = vpow.pop %v1344
        %v1346 = vmul.f32 %v1282, %v1315
        %v1347 = vmul.f32 %v1283, %v1317
        %v1348 = vmul.f32 %v1284, %v1319
        %v1349 = vmul.f32 %v1285, %v1321
        %v1350 = vmul.f32 %v1286, %v1323
        %v1351 = vmul.f32 %v1287, %v1325
        %v1352 = vmul.f32 %v1288, %v1327
        %v1353 = vmul.f32 %v1289, %v1329
        %v1354 = vmul.f32 %v1290, %v1331
        %v1355 = vmul.f32 %v1291, %v1333
        %v1356 = vmul.f32 %v1292, %v1335
        %v1357 = vmul.f32 %v1293, %v1337
        %v1358 = vmul.f32 %v1294, %v1339
        %v1359 = vmul.f32 %v1295, %v1341
        %v1360 = vmul.f32 %v1296, %v1343
        %v1361 = vmul.f32 %v1297, %v1345
        %v1362 = vadd.f32 %v1172, %v1346
        %v1363 = vadd.f32 %v1176, %v1347
        %v1364 = vadd.f32 %v1182, %v1348
        %v1365 = vadd.f32 %v1186, %v1349
        %v1366 = vadd.f32 %v1192, %v1350
        %v1367 = vadd.f32 %v1196, %v1351
        %v1368 = vadd.f32 %v1202, %v1352
        %v1369 = vadd.f32 %v1206, %v1353
        %v1370 = vadd.f32 %v1212, %v1354
        %v1371 = vadd.f32 %v1216, %v1355
        %v1372 = vadd.f32 %v1222, %v1356
        %v1373 = vadd.f32 %v1226, %v1357
        %v1374 = vadd.f32 %v1232, %v1358
        %v1375 = vadd.f32 %v1236, %v1359
        %v1376 = vadd.f32 %v1242, %v1360
        %v1377 = vadd.f32 %v1246, %v1361
        %v1378 = vpack.c.bf16 %v1363, %v1362
        %v1379 = vpack.c.bf16 %v1365, %v1364
        %v1380 = vpack.c.bf16 %v1367, %v1366
        %v1381 = vpack.c.bf16 %v1369, %v1368
        %v1382 = vpack.c.bf16 %v1371, %v1370
        %v1383 = vpack.c.bf16 %v1373, %v1372
        %v1384 = vpack.c.bf16 %v1375, %v1374
        %v1385 = vpack.c.bf16 %v1377, %v1376
        %v1386 = vld [vmem:[#allocation10] sm:$0xff]
        %v1387 = vld [vmem:[#allocation10 + $0x8] sm:$0xff]
        %v1388 = vld [vmem:[#allocation10 + $0x10] sm:$0xff]
        %v1389 = vld [vmem:[#allocation10 + $0x18] sm:$0xff]
        %v1390 = vld [vmem:[#allocation10 + $0x20] sm:$0xff]
        %v1391 = vld [vmem:[#allocation10 + $0x28] sm:$0xff]
        %v1392 = vld [vmem:[#allocation10 + $0x30] sm:$0xff]
        %v1393 = vld [vmem:[#allocation10 + $0x38] sm:$0xff]
        %v1394 = vld [vmem:[#allocation10 + $0x40] sm:$0xff]
        %v1395 = vld [vmem:[#allocation10 + $0x48] sm:$0xff]
        %v1396 = vld [vmem:[#allocation10 + $0x50] sm:$0xff]
        %v1397 = vld [vmem:[#allocation10 + $0x58] sm:$0xff]
        %v1398 = vld [vmem:[#allocation10 + $0x60] sm:$0xff]
        %v1399 = vld [vmem:[#allocation10 + $0x68] sm:$0xff]
        %v1400 = vld [vmem:[#allocation10 + $0x70] sm:$0xff]
        %v1401 = vld [vmem:[#allocation10 + $0x78] sm:$0xff]
        %v1402 = vld [vmem:[%s7] sm:$0x3]
        %v1404 = vlaneseq
        %v1405 = vshrl.u32 %v1404, 7
        %v1406 = vsub.s32 0, %v1405
        %v1407 = vrot.slane %v1402, %v1406
        %v1408 = vlaneseq
        %v1409 = vshrl.u32 %v1408, 7
        %v1410 = vsub.s32 1, %v1409
        %v1411 = vrot.slane %v1402, %v1410
        %v1430 = vunpack.c.l.b16 %v1386
        %v1431 = vunpack.c.h.b16 %v1386
        %v1432 = vunpack.c.l.b16 %v1387
        %v1433 = vunpack.c.h.b16 %v1387
        %v1434 = vunpack.c.l.b16 %v1388
        %v1435 = vunpack.c.h.b16 %v1388
        %v1436 = vunpack.c.l.b16 %v1389
        %v1437 = vunpack.c.h.b16 %v1389
        %v1438 = vunpack.c.l.b16 %v1390
        %v1439 = vunpack.c.h.b16 %v1390
        %v1440 = vunpack.c.l.b16 %v1391
        %v1441 = vunpack.c.h.b16 %v1391
        %v1442 = vunpack.c.l.b16 %v1392
        %v1443 = vunpack.c.h.b16 %v1392
        %v1444 = vunpack.c.l.b16 %v1393
        %v1445 = vunpack.c.h.b16 %v1393
        %v1446 = vunpack.c.l.b16 %v1394
        %v1447 = vunpack.c.h.b16 %v1394
        %v1448 = vunpack.c.l.b16 %v1395
        %v1449 = vunpack.c.h.b16 %v1395
        %v1450 = vunpack.c.l.b16 %v1396
        %v1451 = vunpack.c.h.b16 %v1396
        %v1452 = vunpack.c.l.b16 %v1397
        %v1453 = vunpack.c.h.b16 %v1397
        %v1454 = vunpack.c.l.b16 %v1398
        %v1455 = vunpack.c.h.b16 %v1398
        %v1456 = vunpack.c.l.b16 %v1399
        %v1457 = vunpack.c.h.b16 %v1399
        %v1458 = vunpack.c.l.b16 %v1400
        %v1459 = vunpack.c.h.b16 %v1400
        %v1460 = vunpack.c.l.b16 %v1401
        %v1461 = vunpack.c.h.b16 %v1401
        %v1462 = vpack.c.b16 %v1432, %v1430
        %v1463 = vpack.c.b16 %v1433, %v1431
        %v1464 = vpack.c.b16 %v1436, %v1434
        %v1465 = vpack.c.b16 %v1437, %v1435
        %v1466 = vpack.c.b16 %v1440, %v1438
        %v1467 = vpack.c.b16 %v1441, %v1439
        %v1468 = vpack.c.b16 %v1444, %v1442
        %v1469 = vpack.c.b16 %v1445, %v1443
        %v1470 = vpack.c.b16 %v1448, %v1446
        %v1471 = vpack.c.b16 %v1449, %v1447
        %v1472 = vpack.c.b16 %v1452, %v1450
        %v1473 = vpack.c.b16 %v1453, %v1451
        %v1474 = vpack.c.b16 %v1456, %v1454
        %v1475 = vpack.c.b16 %v1457, %v1455
        %v1476 = vpack.c.b16 %v1460, %v1458
        %v1477 = vpack.c.b16 %v1461, %v1459
        %1494 = vmatprep.subr.bf16.mxu0 %v1477
        %1495 = vmatpush1.bf16.msra.mxu0 %v1476
        %1496 = vmatprep.subr.bf16.mxu0 %v1475
        %1497 = vmatpush1.bf16.msra.mxu0 %v1474
        %1498 = vmatprep.subr.bf16.mxu0 %v1473
        %1499 = vmatpush1.bf16.msra.mxu0 %v1472
        %1500 = vmatprep.subr.bf16.mxu0 %v1471
        %1501 = vmatpush1.bf16.msra.mxu0 %v1470
        %1502 = vmatprep.subr.bf16.mxu0 %v1469
        %1503 = vmatpush1.bf16.msra.mxu0 %v1468
        %1504 = vmatprep.subr.bf16.mxu0 %v1467
        %1505 = vmatpush1.bf16.msra.mxu0 %v1466
        %1506 = vmatprep.subr.bf16.mxu0 %v1465
        %1507 = vmatpush1.bf16.msra.mxu0 %v1464
        %1508 = vmatprep.subr.bf16.mxu0 %v1463
        %1509 = vmatpush1.bf16.msra.mxu0 %v1462
        %1510 = vmatprep.subr.bf16.mxu0 0
        %1511 = vmatpush2.bf16.msra.mxu0 0
        %1512 = vmatprep.subr.bf16.mxu0 0
        %1513 = vmatpush2.bf16.msra.mxu0 0
        %1514 = vmatprep.subr.bf16.mxu0 0
        %1515 = vmatpush2.bf16.msra.mxu0 0
        %1516 = vmatprep.subr.bf16.mxu0 0
        %1517 = vmatpush2.bf16.msra.mxu0 0
        %1518 = vmatprep.subr.bf16.mxu0 0
        %1519 = vmatpush2.bf16.msra.mxu0 0
        %1520 = vmatprep.subr.bf16.mxu0 0
        %1521 = vmatpush2.bf16.msra.mxu0 0
        %1522 = vmatprep.subr.bf16.mxu0 0
        %1523 = vmatpush2.bf16.msra.mxu0 0
        %1524 = vmatprep.subr.bf16.mxu0 0
        %1525 = vmatpush2.bf16.msra.mxu0 0
        %1526 = vmatprep.mubr.bf16.mxu0 0
        %1527 = vmatmul.mubr.bf16.gmra.mxu0 %v1378
        %v1528 = vpop.f32.mrf.mxu0
        %v1529 = vadd.f32 %v1407, %v1528
        %v1530 = vpop.f32.mrf.mxu0
        %v1531 = vadd.f32 %v1411, %v1530
        %v1532 = vpop.f32.mrf.mxu0
        %v1533 = vadd.f32 %v1407, %v1532
        %v1534 = vpop.f32.mrf.mxu0
        %v1535 = vadd.f32 %v1411, %v1534
        %1536 = vmatprep.mubr.bf16.mxu0 0
        %1537 = vmatmul.mubr.bf16.gmra.mxu0 %v1379
        %v1538 = vpop.f32.mrf.mxu0
        %v1539 = vadd.f32 %v1407, %v1538
        %v1540 = vpop.f32.mrf.mxu0
        %v1541 = vadd.f32 %v1411, %v1540
        %v1542 = vpop.f32.mrf.mxu0
        %v1543 = vadd.f32 %v1407, %v1542
        %v1544 = vpop.f32.mrf.mxu0
        %v1545 = vadd.f32 %v1411, %v1544
        %1546 = vmatprep.mubr.bf16.mxu0 0
        %1547 = vmatmul.mubr.bf16.gmra.mxu0 %v1380
        %v1548 = vpop.f32.mrf.mxu0
        %v1549 = vadd.f32 %v1407, %v1548
        %v1550 = vpop.f32.mrf.mxu0
        %v1551 = vadd.f32 %v1411, %v1550
        %v1552 = vpop.f32.mrf.mxu0
        %v1553 = vadd.f32 %v1407, %v1552
        %v1554 = vpop.f32.mrf.mxu0
        %v1555 = vadd.f32 %v1411, %v1554
        %1556 = vmatprep.mubr.bf16.mxu0 0
        %1557 = vmatmul.mubr.bf16.gmra.mxu0 %v1381
        %v1558 = vpop.f32.mrf.mxu0
        %v1559 = vadd.f32 %v1407, %v1558
        %v1560 = vpop.f32.mrf.mxu0
        %v1561 = vadd.f32 %v1411, %v1560
        %v1562 = vpop.f32.mrf.mxu0
        %v1563 = vadd.f32 %v1407, %v1562
        %v1564 = vpop.f32.mrf.mxu0
        %v1565 = vadd.f32 %v1411, %v1564
        %1566 = vmatprep.mubr.bf16.mxu0 0
        %1567 = vmatmul.mubr.bf16.gmra.mxu0 %v1382
        %v1568 = vpop.f32.mrf.mxu0
        %v1569 = vadd.f32 %v1407, %v1568
        %v1570 = vpop.f32.mrf.mxu0
        %v1571 = vadd.f32 %v1411, %v1570
        %v1572 = vpop.f32.mrf.mxu0
        %v1573 = vadd.f32 %v1407, %v1572
        %v1574 = vpop.f32.mrf.mxu0
        %v1575 = vadd.f32 %v1411, %v1574
        %1576 = vmatprep.mubr.bf16.mxu0 0
        %1577 = vmatmul.mubr.bf16.gmra.mxu0 %v1383
        %v1578 = vpop.f32.mrf.mxu0
        %v1579 = vadd.f32 %v1407, %v1578
        %v1580 = vpop.f32.mrf.mxu0
        %v1581 = vadd.f32 %v1411, %v1580
        %v1582 = vpop.f32.mrf.mxu0
        %v1583 = vadd.f32 %v1407, %v1582
        %v1584 = vpop.f32.mrf.mxu0
        %v1585 = vadd.f32 %v1411, %v1584
        %1586 = vmatprep.mubr.bf16.mxu0 0
        %1587 = vmatmul.mubr.bf16.gmra.mxu0 %v1384
        %v1588 = vpop.f32.mrf.mxu0
        %v1589 = vadd.f32 %v1407, %v1588
        %v1590 = vpop.f32.mrf.mxu0
        %v1591 = vadd.f32 %v1411, %v1590
        %v1592 = vpop.f32.mrf.mxu0
        %v1593 = vadd.f32 %v1407, %v1592
        %v1594 = vpop.f32.mrf.mxu0
        %v1595 = vadd.f32 %v1411, %v1594
        %1596 = vmatprep.mubr.bf16.mxu0 0
        %1597 = vmatmul.mubr.bf16.gmra.mxu0 %v1385
        %v1598 = vpop.f32.mrf.mxu0
        %v1599 = vadd.f32 %v1407, %v1598
        %v1600 = vpop.f32.mrf.mxu0
        %v1601 = vadd.f32 %v1411, %v1600
        %v1602 = vpop.f32.mrf.mxu0
        %v1603 = vadd.f32 %v1407, %v1602
        %v1604 = vpop.f32.mrf.mxu0
        %v1605 = vadd.f32 %v1411, %v1604
        %1606 = vdwg.mxu0
        %v1607 = vmax.f32 %v1529, 0.0
        %v1608 = vmax.f32 %v1531, 0.0
        %v1609 = vmax.f32 %v1533, 0.0
        %v1610 = vmax.f32 %v1535, 0.0
        %v1611 = vmax.f32 %v1539, 0.0
        %v1612 = vmax.f32 %v1541, 0.0
        %v1613 = vmax.f32 %v1543, 0.0
        %v1614 = vmax.f32 %v1545, 0.0
        %v1615 = vmax.f32 %v1549, 0.0
        %v1616 = vmax.f32 %v1551, 0.0
        %v1617 = vmax.f32 %v1553, 0.0
        %v1618 = vmax.f32 %v1555, 0.0
        %v1619 = vmax.f32 %v1559, 0.0
        %v1620 = vmax.f32 %v1561, 0.0
        %v1621 = vmax.f32 %v1563, 0.0
        %v1622 = vmax.f32 %v1565, 0.0
        %v1623 = vmax.f32 %v1569, 0.0
        %v1624 = vmax.f32 %v1571, 0.0
        %v1625 = vmax.f32 %v1573, 0.0
        %v1626 = vmax.f32 %v1575, 0.0
        %v1627 = vmax.f32 %v1579, 0.0
        %v1628 = vmax.f32 %v1581, 0.0
        %v1629 = vmax.f32 %v1583, 0.0
        %v1630 = vmax.f32 %v1585, 0.0
        %v1631 = vmax.f32 %v1589, 0.0
        %v1632 = vmax.f32 %v1591, 0.0
        %v1633 = vmax.f32 %v1593, 0.0
        %v1634 = vmax.f32 %v1595, 0.0
        %v1635 = vmax.f32 %v1599, 0.0
        %v1636 = vmax.f32 %v1601, 0.0
        %v1637 = vmax.f32 %v1603, 0.0
        %v1638 = vmax.f32 %v1605, 0.0
        %v1639 = vpack.c.bf16 %v1609, %v1607
        %v1640 = vpack.c.bf16 %v1610, %v1608
        %v1641 = vpack.c.bf16 %v1613, %v1611
        %v1642 = vpack.c.bf16 %v1614, %v1612
        %v1643 = vpack.c.bf16 %v1617, %v1615
        %v1644 = vpack.c.bf16 %v1618, %v1616
        %v1645 = vpack.c.bf16 %v1621, %v1619
        %v1646 = vpack.c.bf16 %v1622, %v1620
        %v1647 = vpack.c.bf16 %v1625, %v1623
        %v1648 = vpack.c.bf16 %v1626, %v1624
        %v1649 = vpack.c.bf16 %v1629, %v1627
        %v1650 = vpack.c.bf16 %v1630, %v1628
        %v1651 = vpack.c.bf16 %v1633, %v1631
        %v1652 = vpack.c.bf16 %v1634, %v1632
        %v1653 = vpack.c.bf16 %v1637, %v1635
        %v1654 = vpack.c.bf16 %v1638, %v1636
        %v1655 = vld [vmem:[#allocation11] sm:$0xff]
        %v1656 = vld [vmem:[#allocation11 + $0x8] sm:$0xff]
        %v1657 = vld [vmem:[#allocation11 + $0x10] sm:$0xff]
        %v1658 = vld [vmem:[#allocation11 + $0x18] sm:$0xff]
        %v1659 = vld [vmem:[#allocation11 + $0x20] sm:$0xff]
        %v1660 = vld [vmem:[#allocation11 + $0x28] sm:$0xff]
        %v1661 = vld [vmem:[#allocation11 + $0x30] sm:$0xff]
        %v1662 = vld [vmem:[#allocation11 + $0x38] sm:$0xff]
        %v1663 = vld [vmem:[#allocation11 + $0x40] sm:$0xff]
        %v1664 = vld [vmem:[#allocation11 + $0x48] sm:$0xff]
        %v1665 = vld [vmem:[#allocation11 + $0x50] sm:$0xff]
        %v1666 = vld [vmem:[#allocation11 + $0x58] sm:$0xff]
        %v1667 = vld [vmem:[#allocation11 + $0x60] sm:$0xff]
        %v1668 = vld [vmem:[#allocation11 + $0x68] sm:$0xff]
        %v1669 = vld [vmem:[#allocation11 + $0x70] sm:$0xff]
        %v1670 = vld [vmem:[#allocation11 + $0x78] sm:$0xff]
        %v1671 = vld [vmem:[#allocation11 + $0x80] sm:$0xff]
        %v1672 = vld [vmem:[#allocation11 + $0x88] sm:$0xff]
        %v1673 = vld [vmem:[#allocation11 + $0x90] sm:$0xff]
        %v1674 = vld [vmem:[#allocation11 + $0x98] sm:$0xff]
        %v1675 = vld [vmem:[#allocation11 + $0xa0] sm:$0xff]
        %v1676 = vld [vmem:[#allocation11 + $0xa8] sm:$0xff]
        %v1677 = vld [vmem:[#allocation11 + $0xb0] sm:$0xff]
        %v1678 = vld [vmem:[#allocation11 + $0xb8] sm:$0xff]
        %v1679 = vld [vmem:[#allocation11 + $0xc0] sm:$0xff]
        %v1680 = vld [vmem:[#allocation11 + $0xc8] sm:$0xff]
        %v1681 = vld [vmem:[#allocation11 + $0xd0] sm:$0xff]
        %v1682 = vld [vmem:[#allocation11 + $0xd8] sm:$0xff]
        %v1683 = vld [vmem:[#allocation11 + $0xe0] sm:$0xff]
        %v1684 = vld [vmem:[#allocation11 + $0xe8] sm:$0xff]
        %v1685 = vld [vmem:[#allocation11 + $0xf0] sm:$0xff]
        %v1686 = vld [vmem:[#allocation11 + $0xf8] sm:$0xff]
        %v1687 = vld [vmem:[%s9] sm:$0x3]
        %v1689 = vlaneseq
        %v1690 = vshrl.u32 %v1689, 7
        %v1691 = vsub.s32 0, %v1690
        %v1692 = vrot.slane %v1687, %v1691
        %v1693 = vlaneseq
        %v1694 = vshrl.u32 %v1693, 7
        %v1695 = vsub.s32 1, %v1694
        %v1696 = vrot.slane %v1687, %v1695
        %v1731 = vunpack.c.l.b16 %v1655
        %v1732 = vunpack.c.h.b16 %v1655
        %v1733 = vunpack.c.l.b16 %v1656
        %v1734 = vunpack.c.h.b16 %v1656
        %v1735 = vunpack.c.l.b16 %v1657
        %v1736 = vunpack.c.h.b16 %v1657
        %v1737 = vunpack.c.l.b16 %v1658
        %v1738 = vunpack.c.h.b16 %v1658
        %v1739 = vunpack.c.l.b16 %v1659
        %v1740 = vunpack.c.h.b16 %v1659
        %v1741 = vunpack.c.l.b16 %v1660
        %v1742 = vunpack.c.h.b16 %v1660
        %v1743 = vunpack.c.l.b16 %v1661
        %v1744 = vunpack.c.h.b16 %v1661
        %v1745 = vunpack.c.l.b16 %v1662
        %v1746 = vunpack.c.h.b16 %v1662
        %v1747 = vunpack.c.l.b16 %v1663
        %v1748 = vunpack.c.h.b16 %v1663
        %v1749 = vunpack.c.l.b16 %v1664
        %v1750 = vunpack.c.h.b16 %v1664
        %v1751 = vunpack.c.l.b16 %v1665
        %v1752 = vunpack.c.h.b16 %v1665
        %v1753 = vunpack.c.l.b16 %v1666
        %v1754 = vunpack.c.h.b16 %v1666
        %v1755 = vunpack.c.l.b16 %v1667
        %v1756 = vunpack.c.h.b16 %v1667
        %v1757 = vunpack.c.l.b16 %v1668
        %v1758 = vunpack.c.h.b16 %v1668
        %v1759 = vunpack.c.l.b16 %v1669
        %v1760 = vunpack.c.h.b16 %v1669
        %v1761 = vunpack.c.l.b16 %v1670
        %v1762 = vunpack.c.h.b16 %v1670
        %v1763 = vunpack.c.l.b16 %v1671
        %v1764 = vunpack.c.h.b16 %v1671
        %v1765 = vunpack.c.l.b16 %v1672
        %v1766 = vunpack.c.h.b16 %v1672
        %v1767 = vunpack.c.l.b16 %v1673
        %v1768 = vunpack.c.h.b16 %v1673
        %v1769 = vunpack.c.l.b16 %v1674
        %v1770 = vunpack.c.h.b16 %v1674
        %v1771 = vunpack.c.l.b16 %v1675
        %v1772 = vunpack.c.h.b16 %v1675
        %v1773 = vunpack.c.l.b16 %v1676
        %v1774 = vunpack.c.h.b16 %v1676
        %v1775 = vunpack.c.l.b16 %v1677
        %v1776 = vunpack.c.h.b16 %v1677
        %v1777 = vunpack.c.l.b16 %v1678
        %v1778 = vunpack.c.h.b16 %v1678
        %v1779 = vunpack.c.l.b16 %v1679
        %v1780 = vunpack.c.h.b16 %v1679
        %v1781 = vunpack.c.l.b16 %v1680
        %v1782 = vunpack.c.h.b16 %v1680
        %v1783 = vunpack.c.l.b16 %v1681
        %v1784 = vunpack.c.h.b16 %v1681
        %v1785 = vunpack.c.l.b16 %v1682
        %v1786 = vunpack.c.h.b16 %v1682
        %v1787 = vunpack.c.l.b16 %v1683
        %v1788 = vunpack.c.h.b16 %v1683
        %v1789 = vunpack.c.l.b16 %v1684
        %v1790 = vunpack.c.h.b16 %v1684
        %v1791 = vunpack.c.l.b16 %v1685
        %v1792 = vunpack.c.h.b16 %v1685
        %v1793 = vunpack.c.l.b16 %v1686
        %v1794 = vunpack.c.h.b16 %v1686
        %v1795 = vpack.c.b16 %v1733, %v1731
        %v1796 = vpack.c.b16 %v1734, %v1732
        %v1797 = vpack.c.b16 %v1737, %v1735
        %v1798 = vpack.c.b16 %v1738, %v1736
        %v1799 = vpack.c.b16 %v1741, %v1739
        %v1800 = vpack.c.b16 %v1742, %v1740
        %v1801 = vpack.c.b16 %v1745, %v1743
        %v1802 = vpack.c.b16 %v1746, %v1744
        %v1803 = vpack.c.b16 %v1749, %v1747
        %v1804 = vpack.c.b16 %v1750, %v1748
        %v1805 = vpack.c.b16 %v1753, %v1751
        %v1806 = vpack.c.b16 %v1754, %v1752
        %v1807 = vpack.c.b16 %v1757, %v1755
        %v1808 = vpack.c.b16 %v1758, %v1756
        %v1809 = vpack.c.b16 %v1761, %v1759
        %v1810 = vpack.c.b16 %v1762, %v1760
        %v1811 = vpack.c.b16 %v1765, %v1763
        %v1812 = vpack.c.b16 %v1766, %v1764
        %v1813 = vpack.c.b16 %v1769, %v1767
        %v1814 = vpack.c.b16 %v1770, %v1768
        %v1815 = vpack.c.b16 %v1773, %v1771
        %v1816 = vpack.c.b16 %v1774, %v1772
        %v1817 = vpack.c.b16 %v1777, %v1775
        %v1818 = vpack.c.b16 %v1778, %v1776
        %v1819 = vpack.c.b16 %v1781, %v1779
        %v1820 = vpack.c.b16 %v1782, %v1780
        %v1821 = vpack.c.b16 %v1785, %v1783
        %v1822 = vpack.c.b16 %v1786, %v1784
        %v1823 = vpack.c.b16 %v1789, %v1787
        %v1824 = vpack.c.b16 %v1790, %v1788
        %v1825 = vpack.c.b16 %v1793, %v1791
        %v1826 = vpack.c.b16 %v1794, %v1792
        %1859 = vmatprep.subr.bf16.mxu0 %v1810
        %1860 = vmatpush1.bf16.msra.mxu0 %v1809
        %1861 = vmatprep.subr.bf16.mxu0 %v1808
        %1862 = vmatpush1.bf16.msra.mxu0 %v1807
        %1863 = vmatprep.subr.bf16.mxu0 %v1806
        %1864 = vmatpush1.bf16.msra.mxu0 %v1805
        %1865 = vmatprep.subr.bf16.mxu0 %v1804
        %1866 = vmatpush1.bf16.msra.mxu0 %v1803
        %1867 = vmatprep.subr.bf16.mxu0 %v1802
        %1868 = vmatpush1.bf16.msra.mxu0 %v1801
        %1869 = vmatprep.subr.bf16.mxu0 %v1800
        %1870 = vmatpush1.bf16.msra.mxu0 %v1799
        %1871 = vmatprep.subr.bf16.mxu0 %v1798
        %1872 = vmatpush1.bf16.msra.mxu0 %v1797
        %1873 = vmatprep.subr.bf16.mxu0 %v1796
        %1874 = vmatpush1.bf16.msra.mxu0 %v1795
        %1875 = vmatprep.subr.bf16.mxu0 %v1826
        %1876 = vmatpush2.bf16.msra.mxu0 %v1825
        %1877 = vmatprep.subr.bf16.mxu0 %v1824
        %1878 = vmatpush2.bf16.msra.mxu0 %v1823
        %1879 = vmatprep.subr.bf16.mxu0 %v1822
        %1880 = vmatpush2.bf16.msra.mxu0 %v1821
        %1881 = vmatprep.subr.bf16.mxu0 %v1820
        %1882 = vmatpush2.bf16.msra.mxu0 %v1819
        %1883 = vmatprep.subr.bf16.mxu0 %v1818
        %1884 = vmatpush2.bf16.msra.mxu0 %v1817
        %1885 = vmatprep.subr.bf16.mxu0 %v1816
        %1886 = vmatpush2.bf16.msra.mxu0 %v1815
        %1887 = vmatprep.subr.bf16.mxu0 %v1814
        %1888 = vmatpush2.bf16.msra.mxu0 %v1813
        %1889 = vmatprep.subr.bf16.mxu0 %v1812
        %1890 = vmatpush2.bf16.msra.mxu0 %v1811
        %1891 = vmatprep.mubr.bf16.mxu0 %v1640
        %1892 = vmatmul.mubr.bf16.gmra.mxu0 %v1639
        %v1893 = vpop.f32.mrf.mxu0
        %v1894 = vadd.f32 %v1692, %v1893
        %v1895 = vpop.f32.mrf.mxu0
        %v1896 = vadd.f32 %v1696, %v1895
        %v1897 = vpop.f32.mrf.mxu0
        %v1898 = vadd.f32 %v1692, %v1897
        %v1899 = vpop.f32.mrf.mxu0
        %v1900 = vadd.f32 %v1696, %v1899
        %1901 = vmatprep.mubr.bf16.mxu0 %v1642
        %1902 = vmatmul.mubr.bf16.gmra.mxu0 %v1641
        %v1903 = vpop.f32.mrf.mxu0
        %v1904 = vadd.f32 %v1692, %v1903
        %v1905 = vpop.f32.mrf.mxu0
        %v1906 = vadd.f32 %v1696, %v1905
        %v1907 = vpop.f32.mrf.mxu0
        %v1908 = vadd.f32 %v1692, %v1907
        %v1909 = vpop.f32.mrf.mxu0
        %v1910 = vadd.f32 %v1696, %v1909
        %1911 = vmatprep.mubr.bf16.mxu0 %v1644
        %1912 = vmatmul.mubr.bf16.gmra.mxu0 %v1643
        %v1913 = vpop.f32.mrf.mxu0
        %v1914 = vadd.f32 %v1692, %v1913
        %v1915 = vpop.f32.mrf.mxu0
        %v1916 = vadd.f32 %v1696, %v1915
        %v1917 = vpop.f32.mrf.mxu0
        %v1918 = vadd.f32 %v1692, %v1917
        %v1919 = vpop.f32.mrf.mxu0
        %v1920 = vadd.f32 %v1696, %v1919
        %1921 = vmatprep.mubr.bf16.mxu0 %v1646
        %1922 = vmatmul.mubr.bf16.gmra.mxu0 %v1645
        %v1923 = vpop.f32.mrf.mxu0
        %v1924 = vadd.f32 %v1692, %v1923
        %v1925 = vpop.f32.mrf.mxu0
        %v1926 = vadd.f32 %v1696, %v1925
        %v1927 = vpop.f32.mrf.mxu0
        %v1928 = vadd.f32 %v1692, %v1927
        %v1929 = vpop.f32.mrf.mxu0
        %v1930 = vadd.f32 %v1696, %v1929
        %1931 = vmatprep.mubr.bf16.mxu0 %v1648
        %1932 = vmatmul.mubr.bf16.gmra.mxu0 %v1647
        %v1933 = vpop.f32.mrf.mxu0
        %v1934 = vadd.f32 %v1692, %v1933
        %v1935 = vpop.f32.mrf.mxu0
        %v1936 = vadd.f32 %v1696, %v1935
        %v1937 = vpop.f32.mrf.mxu0
        %v1938 = vadd.f32 %v1692, %v1937
        %v1939 = vpop.f32.mrf.mxu0
        %v1940 = vadd.f32 %v1696, %v1939
        %1941 = vmatprep.mubr.bf16.mxu0 %v1650
        %1942 = vmatmul.mubr.bf16.gmra.mxu0 %v1649
        %v1943 = vpop.f32.mrf.mxu0
        %v1944 = vadd.f32 %v1692, %v1943
        %v1945 = vpop.f32.mrf.mxu0
        %v1946 = vadd.f32 %v1696, %v1945
        %v1947 = vpop.f32.mrf.mxu0
        %v1948 = vadd.f32 %v1692, %v1947
        %v1949 = vpop.f32.mrf.mxu0
        %v1950 = vadd.f32 %v1696, %v1949
        %1951 = vmatprep.mubr.bf16.mxu0 %v1652
        %1952 = vmatmul.mubr.bf16.gmra.mxu0 %v1651
        %v1953 = vpop.f32.mrf.mxu0
        %v1954 = vadd.f32 %v1692, %v1953
        %v1955 = vpop.f32.mrf.mxu0
        %v1956 = vadd.f32 %v1696, %v1955
        %v1957 = vpop.f32.mrf.mxu0
        %v1958 = vadd.f32 %v1692, %v1957
        %v1959 = vpop.f32.mrf.mxu0
        %v1960 = vadd.f32 %v1696, %v1959
        %1961 = vmatprep.mubr.bf16.mxu0 %v1654
        %1962 = vmatmul.mubr.bf16.gmra.mxu0 %v1653
        %v1963 = vpop.f32.mrf.mxu0
        %v1964 = vadd.f32 %v1692, %v1963
        %v1965 = vpop.f32.mrf.mxu0
        %v1966 = vadd.f32 %v1696, %v1965
        %v1967 = vpop.f32.mrf.mxu0
        %v1968 = vadd.f32 %v1692, %v1967
        %v1969 = vpop.f32.mrf.mxu0
        %v1970 = vadd.f32 %v1696, %v1969
        %1971 = vdwg.mxu0
        %v1972 = vxor.u32 %v1894, 2147483648
        %v1973 = vxor.u32 %v1896, 2147483648
        %v1974 = vxor.u32 %v1898, 2147483648
        %v1975 = vxor.u32 %v1900, 2147483648
        %v1976 = vxor.u32 %v1904, 2147483648
        %v1977 = vxor.u32 %v1906, 2147483648
        %v1978 = vxor.u32 %v1908, 2147483648
        %v1979 = vxor.u32 %v1910, 2147483648
        %v1980 = vxor.u32 %v1914, 2147483648
        %v1981 = vxor.u32 %v1916, 2147483648
        %v1982 = vxor.u32 %v1918, 2147483648
        %v1983 = vxor.u32 %v1920, 2147483648
        %v1984 = vxor.u32 %v1924, 2147483648
        %v1985 = vxor.u32 %v1926, 2147483648
        %v1986 = vxor.u32 %v1928, 2147483648
        %v1987 = vxor.u32 %v1930, 2147483648
        %v1988 = vxor.u32 %v1934, 2147483648
        %v1989 = vxor.u32 %v1936, 2147483648
        %v1990 = vxor.u32 %v1938, 2147483648
        %v1991 = vxor.u32 %v1940, 2147483648
        %v1992 = vxor.u32 %v1944, 2147483648
        %v1993 = vxor.u32 %v1946, 2147483648
        %v1994 = vxor.u32 %v1948, 2147483648
        %v1995 = vxor.u32 %v1950, 2147483648
        %v1996 = vxor.u32 %v1954, 2147483648
        %v1997 = vxor.u32 %v1956, 2147483648
        %v1998 = vxor.u32 %v1958, 2147483648
        %v1999 = vxor.u32 %v1960, 2147483648
        %v2000 = vxor.u32 %v1964, 2147483648
        %v2001 = vxor.u32 %v1966, 2147483648
        %v2002 = vxor.u32 %v1968, 2147483648
        %v2003 = vxor.u32 %v1970, 2147483648
        %v2004 = vmul.f32 %v1972, 1.442695
        %v2005 = vpow.pop %v2004
        %v2006 = vmul.f32 %v1973, 1.442695
        %v2007 = vpow.pop %v2006
        %v2008 = vmul.f32 %v1974, 1.442695
        %v2009 = vpow.pop %v2008
        %v2010 = vmul.f32 %v1975, 1.442695
        %v2011 = vpow.pop %v2010
        %v2012 = vmul.f32 %v1976, 1.442695
        %v2013 = vpow.pop %v2012
        %v2014 = vmul.f32 %v1977, 1.442695
        %v2015 = vpow.pop %v2014
        %v2016 = vmul.f32 %v1978, 1.442695
        %v2017 = vpow.pop %v2016
        %v2018 = vmul.f32 %v1979, 1.442695
        %v2019 = vpow.pop %v2018
        %v2020 = vmul.f32 %v1980, 1.442695
        %v2021 = vpow.pop %v2020
        %v2022 = vmul.f32 %v1981, 1.442695
        %v2023 = vpow.pop %v2022
        %v2024 = vmul.f32 %v1982, 1.442695
        %v2025 = vpow.pop %v2024
        %v2026 = vmul.f32 %v1983, 1.442695
        %v2027 = vpow.pop %v2026
        %v2028 = vmul.f32 %v1984, 1.442695
        %v2029 = vpow.pop %v2028
        %v2030 = vmul.f32 %v1985, 1.442695
        %v2031 = vpow.pop %v2030
        %v2032 = vmul.f32 %v1986, 1.442695
        %v2033 = vpow.pop %v2032
        %v2034 = vmul.f32 %v1987, 1.442695
        %v2035 = vpow.pop %v2034
        %v2036 = vmul.f32 %v1988, 1.442695
        %v2037 = vpow.pop %v2036
        %v2038 = vmul.f32 %v1989, 1.442695
        %v2039 = vpow.pop %v2038
        %v2040 = vmul.f32 %v1990, 1.442695
        %v2041 = vpow.pop %v2040
        %v2042 = vmul.f32 %v1991, 1.442695
        %v2043 = vpow.pop %v2042
        %v2044 = vmul.f32 %v1992, 1.442695
        %v2045 = vpow.pop %v2044
        %v2046 = vmul.f32 %v1993, 1.442695
        %v2047 = vpow.pop %v2046
        %v2048 = vmul.f32 %v1994, 1.442695
        %v2049 = vpow.pop %v2048
        %v2050 = vmul.f32 %v1995, 1.442695
        %v2051 = vpow.pop %v2050
        %v2052 = vmul.f32 %v1996, 1.442695
        %v2053 = vpow.pop %v2052
        %v2054 = vmul.f32 %v1997, 1.442695
        %v2055 = vpow.pop %v2054
        %v2056 = vmul.f32 %v1998, 1.442695
        %v2057 = vpow.pop %v2056
        %v2058 = vmul.f32 %v1999, 1.442695
        %v2059 = vpow.pop %v2058
        %v2060 = vmul.f32 %v2000, 1.442695
        %v2061 = vpow.pop %v2060
        %v2062 = vmul.f32 %v2001, 1.442695
        %v2063 = vpow.pop %v2062
        %v2064 = vmul.f32 %v2002, 1.442695
        %v2065 = vpow.pop %v2064
        %v2066 = vmul.f32 %v2003, 1.442695
        %v2067 = vpow.pop %v2066
        %v2068 = vadd.f32 %v2005, 1.0
        %v2069 = vadd.f32 %v2007, 1.0
        %v2070 = vadd.f32 %v2009, 1.0
        %v2071 = vadd.f32 %v2011, 1.0
        %v2072 = vadd.f32 %v2013, 1.0
        %v2073 = vadd.f32 %v2015, 1.0
        %v2074 = vadd.f32 %v2017, 1.0
        %v2075 = vadd.f32 %v2019, 1.0
        %v2076 = vadd.f32 %v2021, 1.0
        %v2077 = vadd.f32 %v2023, 1.0
        %v2078 = vadd.f32 %v2025, 1.0
        %v2079 = vadd.f32 %v2027, 1.0
        %v2080 = vadd.f32 %v2029, 1.0
        %v2081 = vadd.f32 %v2031, 1.0
        %v2082 = vadd.f32 %v2033, 1.0
        %v2083 = vadd.f32 %v2035, 1.0
        %v2084 = vadd.f32 %v2037, 1.0
        %v2085 = vadd.f32 %v2039, 1.0
        %v2086 = vadd.f32 %v2041, 1.0
        %v2087 = vadd.f32 %v2043, 1.0
        %v2088 = vadd.f32 %v2045, 1.0
        %v2089 = vadd.f32 %v2047, 1.0
        %v2090 = vadd.f32 %v2049, 1.0
        %v2091 = vadd.f32 %v2051, 1.0
        %v2092 = vadd.f32 %v2053, 1.0
        %v2093 = vadd.f32 %v2055, 1.0
        %v2094 = vadd.f32 %v2057, 1.0
        %v2095 = vadd.f32 %v2059, 1.0
        %v2096 = vadd.f32 %v2061, 1.0
        %v2097 = vadd.f32 %v2063, 1.0
        %v2098 = vadd.f32 %v2065, 1.0
        %v2099 = vadd.f32 %v2067, 1.0
        %v2100 = vrcp.pop %v2068
        %v2101 = vmul.f32 1.0, %v2100
        %v2102 = vrcp.pop %v2069
        %v2103 = vmul.f32 1.0, %v2102
        %v2104 = vrcp.pop %v2070
        %v2105 = vmul.f32 1.0, %v2104
        %v2106 = vrcp.pop %v2071
        %v2107 = vmul.f32 1.0, %v2106
        %v2108 = vrcp.pop %v2072
        %v2109 = vmul.f32 1.0, %v2108
        %v2110 = vrcp.pop %v2073
        %v2111 = vmul.f32 1.0, %v2110
        %v2112 = vrcp.pop %v2074
        %v2113 = vmul.f32 1.0, %v2112
        %v2114 = vrcp.pop %v2075
        %v2115 = vmul.f32 1.0, %v2114
        %v2116 = vrcp.pop %v2076
        %v2117 = vmul.f32 1.0, %v2116
        %v2118 = vrcp.pop %v2077
        %v2119 = vmul.f32 1.0, %v2118
        %v2120 = vrcp.pop %v2078
        %v2121 = vmul.f32 1.0, %v2120
        %v2122 = vrcp.pop %v2079
        %v2123 = vmul.f32 1.0, %v2122
        %v2124 = vrcp.pop %v2080
        %v2125 = vmul.f32 1.0, %v2124
        %v2126 = vrcp.pop %v2081
        %v2127 = vmul.f32 1.0, %v2126
        %v2128 = vrcp.pop %v2082
        %v2129 = vmul.f32 1.0, %v2128
        %v2130 = vrcp.pop %v2083
        %v2131 = vmul.f32 1.0, %v2130
        %v2132 = vrcp.pop %v2084
        %v2133 = vmul.f32 1.0, %v2132
        %v2134 = vrcp.pop %v2085
        %v2135 = vmul.f32 1.0, %v2134
        %v2136 = vrcp.pop %v2086
        %v2137 = vmul.f32 1.0, %v2136
        %v2138 = vrcp.pop %v2087
        %v2139 = vmul.f32 1.0, %v2138
        %v2140 = vrcp.pop %v2088
        %v2141 = vmul.f32 1.0, %v2140
        %v2142 = vrcp.pop %v2089
        %v2143 = vmul.f32 1.0, %v2142
        %v2144 = vrcp.pop %v2090
        %v2145 = vmul.f32 1.0, %v2144
        %v2146 = vrcp.pop %v2091
        %v2147 = vmul.f32 1.0, %v2146
        %v2148 = vrcp.pop %v2092
        %v2149 = vmul.f32 1.0, %v2148
        %v2150 = vrcp.pop %v2093
        %v2151 = vmul.f32 1.0, %v2150
        %v2152 = vrcp.pop %v2094
        %v2153 = vmul.f32 1.0, %v2152
        %v2154 = vrcp.pop %v2095
        %v2155 = vmul.f32 1.0, %v2154
        %v2156 = vrcp.pop %v2096
        %v2157 = vmul.f32 1.0, %v2156
        %v2158 = vrcp.pop %v2097
        %v2159 = vmul.f32 1.0, %v2158
        %v2160 = vrcp.pop %v2098
        %v2161 = vmul.f32 1.0, %v2160
        %v2162 = vrcp.pop %v2099
        %v2163 = vmul.f32 1.0, %v2162
        %2164 = vst [vmem:[%s507] sm:$0xff] %v2101
        %2165 = vst [vmem:[%s507 + $0x8] sm:$0xff] %v2103
        %2166 = vst [vmem:[%s507 + $0x10] sm:$0xff] %v2105
        %2167 = vst [vmem:[%s507 + $0x18] sm:$0xff] %v2107
        %2168 = vst [vmem:[%s507 + $0x20] sm:$0xff] %v2109
        %2169 = vst [vmem:[%s507 + $0x28] sm:$0xff] %v2111
        %2170 = vst [vmem:[%s507 + $0x30] sm:$0xff] %v2113
        %2171 = vst [vmem:[%s507 + $0x38] sm:$0xff] %v2115
        %2172 = vst [vmem:[%s507 + $0x40] sm:$0xff] %v2117
        %2173 = vst [vmem:[%s507 + $0x48] sm:$0xff] %v2119
        %2174 = vst [vmem:[%s507 + $0x50] sm:$0xff] %v2121
        %2175 = vst [vmem:[%s507 + $0x58] sm:$0xff] %v2123
        %2176 = vst [vmem:[%s507 + $0x60] sm:$0xff] %v2125
        %2177 = vst [vmem:[%s507 + $0x68] sm:$0xff] %v2127
        %2178 = vst [vmem:[%s507 + $0x70] sm:$0xff] %v2129
        %2179 = vst [vmem:[%s507 + $0x78] sm:$0xff] %v2131
        %2180 = vst [vmem:[%s507 + $0x80] sm:$0xff] %v2133
        %2181 = vst [vmem:[%s507 + $0x88] sm:$0xff] %v2135
        %2182 = vst [vmem:[%s507 + $0x90] sm:$0xff] %v2137
        %2183 = vst [vmem:[%s507 + $0x98] sm:$0xff] %v2139
        %2184 = vst [vmem:[%s507 + $0xa0] sm:$0xff] %v2141
        %2185 = vst [vmem:[%s507 + $0xa8] sm:$0xff] %v2143
        %2186 = vst [vmem:[%s507 + $0xb0] sm:$0xff] %v2145
        %2187 = vst [vmem:[%s507 + $0xb8] sm:$0xff] %v2147
        %2188 = vst [vmem:[%s507 + $0xc0] sm:$0xff] %v2149
        %2189 = vst [vmem:[%s507 + $0xc8] sm:$0xff] %v2151
        %2190 = vst [vmem:[%s507 + $0xd0] sm:$0xff] %v2153
        %2191 = vst [vmem:[%s507 + $0xd8] sm:$0xff] %v2155
        %2192 = vst [vmem:[%s507 + $0xe0] sm:$0xff] %v2157
        %2193 = vst [vmem:[%s507 + $0xe8] sm:$0xff] %v2159
        %2194 = vst [vmem:[%s507 + $0xf0] sm:$0xff] %v2161
        %2195 = vst [vmem:[%s507 + $0xf8] sm:$0xff] %v2163
        %s2196 = sand.u32 %s265, 1
        %s2197 = scalar_lea.sflag [#allocation4], %s2196
        %s2198 = sand.u32 %s265, 1
        %s2199 = smul.addr %s2198, 256
        %s2200 = scalar_lea.vmem [#allocation13], %s2199
        %s2201 = sand.u32 %s291, 1
        %s2202 = scalar_lea.sflag [#allocation15], %s2201
        %s2203 = sand.u32 %s291, 1
        %s2204 = smul.addr %s2203, 256
        %s2205 = scalar_lea.vmem [#allocation14], %s2204
        // Predicated region
        $region85: #{tpu_custom_call.1} parent=59 // pred_check
          %p2206 = pneg %p275
        $region86: #{tpu_custom_call.1} parent=59 // pred_check_branch
          %2208 = sbr.rel (%p2206) target = $region88
        $region87: #{tpu_custom_call.1} parent=59 // pred_region
          %s2209 = smul.u32 16, %s37
          %s2211 = ssub.s32 4096, 4096
          %2212 = vsyncadd %s2197, %s2211
          %s2213 = smul.addr %s2209, 2
          %s2214 = smul.addr %s2213, 128
          %s2215 = scalar_lea.hbm %s10, %s2214
          %s2216 = sshll.u32 %s2200, 4
          %s2217 = int_to_ptr.vmem [resolvable:$true] %s2216
          %2222 = dma.vmem_to_hbm [thread:$0]  %s2217, 4096, %s2215, %s2197, 256, 256, 16
        $region88: #{tpu_custom_call.1} parent=59 // pred_fallthru
          _
        // Predicated region
        $region89: #{tpu_custom_call.1} parent=59 // pred_check
          %p2223 = pneg %p301
        $region90: #{tpu_custom_call.1} parent=59 // pred_check_branch
          %2225 = sbr.rel (%p2223) target = $region92
        $region91: #{tpu_custom_call.1} parent=59 // pred_region
          %s2226 = smul.u32 16, %s37
          %s2228 = ssub.s32 4096, 4096
          %2229 = vsyncadd %s2202, %s2228
          %s2230 = smul.addr %s2226, 2
          %s2231 = smul.addr %s2230, 128
          %s2232 = scalar_lea.hbm %s11, %s2231
          %s2233 = sshll.u32 %s2205, 4
          %s2234 = int_to_ptr.vmem [resolvable:$true] %s2233
          %2239 = dma.vmem_to_hbm [thread:$0]  %s2234, 4096, %s2232, %s2202, 256, 256, 16
        $region92: #{tpu_custom_call.1} parent=59 // pred_fallthru
          _
      $region60: #{tpu_custom_call.1} parent=5 // pred_fallthru
        _
      %p2240 = scmp.le.s32.totalorder 2, %s32
      // Predicated region
      $region93: #{tpu_custom_call.1} parent=5 // pred_check
        %p2241 = pneg %p2240
      $region94: #{tpu_custom_call.1} parent=5 // pred_check_branch
        %2243 = sbr.rel (%p2241) target = $region96
      $region95: #{tpu_custom_call.1} parent=5 // pred_region
        %s2244 = ssub.s32 %s32, 2
        // Predicated region
        $region97: #{tpu_custom_call.1} parent=95 // pred_check
          %p2245 = pneg %p281
        $region98: #{tpu_custom_call.1} parent=95 // pred_check_branch
          %2247 = sbr.rel (%p2245) target = $region100
        $region99: #{tpu_custom_call.1} parent=95 // pred_region
          %s2248 = sand.u32 %s266, 1
          %s2249 = scalar_lea.sflag [#allocation4], %s2248
          %s2250 = sand.u32 %s266, 1
          %s2251 = smul.addr %s2250, 256
          %s2252 = scalar_lea.vmem [#allocation13], %s2251
          %2253 = dma.done %s2249, 4096
        $region100: #{tpu_custom_call.1} parent=95 // pred_fallthru
          _
        // Predicated region
        $region101: #{tpu_custom_call.1} parent=95 // pred_check
          %p2254 = pneg %p307
        $region102: #{tpu_custom_call.1} parent=95 // pred_check_branch
          %2256 = sbr.rel (%p2254) target = $region104
        $region103: #{tpu_custom_call.1} parent=95 // pred_region
          %s2257 = sand.u32 %s292, 1
          %s2258 = scalar_lea.sflag [#allocation15], %s2257
          %s2259 = sand.u32 %s292, 1
          %s2260 = smul.addr %s2259, 256
          %s2261 = scalar_lea.vmem [#allocation14], %s2260
          %2262 = dma.done %s2258, 4096
        $region104: #{tpu_custom_call.1} parent=95 // pred_fallthru
          _
      $region96: #{tpu_custom_call.1} parent=5 // pred_fallthru
        _
    $region6: #{tpu_custom_call.1} parent=1 // loop_footer
      %s36 = sadd.s32 1, %s32
    $region7: #{tpu_custom_call.1} parent=1 // loop_footer_branch
      %31 = sbr.rel target = $region3
    $region8: #{tpu_custom_call.1} parent=1 // loop_exit
      _
    %2263 = vsyncpa [#allocation3], 1
    %s2264 = scalar_lea.sflag [#allocation3], 1
    %2265 = vsyncpa %s2264, 1
    %2266 = vsyncpa [#allocation6], 1
    %s2267 = scalar_lea.sflag [#allocation6], 1
    %2268 = vsyncpa %s2267, 1
    %2269 = vsyncpa [#allocation9], 1
    %2270 = vsyncpa [#allocation12], 1
    %2271 = vsyncpa [#allocation4], 1
    %s2272 = scalar_lea.sflag [#allocation4], 1
    %2273 = vsyncpa %s2272, 1
    %2274 = vsyncpa [#allocation15], 1
    %s2275 = scalar_lea.sflag [#allocation15], 1
    %2276 = vsyncpa %s2275, 1

</llo_original>
